<compile_context>
chip_gen: v5e
topology: v5e:2x2
jax: 0.10.0
libtpu: 0.0.40
codegen_flags: <defaults>
</compile_context>

<pallas_src>
import jax
import jax.numpy as jnp
from jax.experimental import pallas as pl
from jax.experimental.pallas import tpu as pltpu

# ----- module hyper-parameters -----
PRE = 8            # pre_channels (== out_channels, required by the final broadcast)
F = 32             # f_channels
OUT = 8            # out_channels
K = 6              # k (number of neighbor points, axis that gets max-reduced)
M = 64             # main_channel
C = PRE + F + 3    # per-point channel count of x
NEG_SLOPE = 0.01   # nn.LeakyReLU default negative_slope


def _lrelu(v):
    # max(v, slope*v) == LeakyReLU for slope in (0,1); one VPU op cheaper than where()
    return jnp.maximum(v, NEG_SLOPE * v)


def _default_group():
    """k-group size matched to the MXU width: 2 on 128-wide (<=v5), 4 on 256-wide."""
    try:
        kind = jax.devices()[0].device_kind.lower()
    except Exception:
        return 4
    for tag in ("v2", "v3", "v4", "v5"):
        if tag in kind:
            return 2
    return 4


def _partition_k(group):
    sizes, rem = [], K
    while rem > 0:
        s = min(group, rem)
        sizes.append(s)
        rem -= s
    return tuple(sizes)


def _block_diag(w, s):
    m, n = w.shape
    out = jnp.zeros((m * s, n * s), w.dtype)
    for j in range(s):
        out = out.at[j * m:(j + 1) * m, j * n:(j + 1) * n].set(w)
    return out


def _entry_group_weight(params, s):
    """[C*s, 2*M*s] entry weight for a contiguous group of s neighbor points.

    The lhs is the raw per-point channel slab (pre | feature | offset~tanh'ed) for
    the s points.  Columns are [tmp_in_0..tmp_in_{s-1} | ow_0..ow_{s-1}] so the two
    activations split on a 128-aligned lane boundary.  PRE rows are zero.
    """
    w = jnp.zeros((C * s, 2 * M * s), jnp.float32)
    for j in range(s):
        r0 = j * C
        w = w.at[r0 + PRE:r0 + PRE + F, j * M:(j + 1) * M].set(params['w_in'])
        w = w.at[r0 + PRE + F:r0 + C,
                 s * M + j * M:s * M + (j + 1) * M].set(params['w_off'])
    return w


def _make_kernel(sizes, distinct):
    nd = len(distinct)
    size_idx = {s: i for i, s in enumerate(distinct)}
    starts, off = [], 0
    for s in sizes:
        starts.append(off)
        off += s

    def kernel(x_ref, mask_ref, *refs):
        *w_refs, out_ref = refs
        ew = w_refs[0:nd]
        dw = w_refs[nd:2 * nd]
        t1w = w_refs[2 * nd:3 * nd]
        t2w = w_refs[3 * nd:4 * nd]
        (b_in_t, b_off_t, b_diff_t, b_t1_t, b_t2_t,
         w_o1, b_o1, w_o2) = w_refs[4 * nd:]

        f32, bf16 = jnp.float32, jnp.bfloat16
        xrow = x_ref[...].astype(f32)                           # [tb, K*C]
        # tanh the offset lanes of the whole row slab once; PRE lanes are killed by
        # the zero rows of the entry weights, feature lanes pass through unchanged.
        off_mask = mask_ref[...] != 0.0                         # [1, K*C]
        x_act = jnp.where(off_mask, jnp.tanh(xrow), xrow).astype(bf16)

        b_in, b_off = b_in_t[...], b_off_t[...]
        b_diff, b_t1, b_t2 = b_diff_t[...], b_t1_t[...], b_t2_t[...]

        tmp_in0 = None
        m = None
        for g, s in enumerate(sizes):                           # <=3 static iterations
            i = size_idx[s]
            span = M * s
            lhs = x_act[:, starts[g] * C:(starts[g] + s) * C]   # [tb, C*s] contiguous
            z = jnp.dot(lhs, ew[i][...], preferred_element_type=f32)   # [tb, 2*M*s]
            tmp_in_g = _lrelu(z[:, :span] + b_in[:, :span])     # f32 [tb, M*s]
            ow_g = jnp.tanh(z[:, span:] + b_off[:, :span])      # f32 [tb, M*s]
            if g == 0:
                tmp_in0 = tmp_in_g[:, :M]                       # k == 0 slab
            sub = jnp.concatenate([tmp_in0] * s, axis=-1) if s > 1 else tmp_in0
            dlhs = (tmp_in_g - sub).astype(bf16)
            # note: the k==0 slot of this block-diagonal matmul is the (zero-input)
            # diff term; it rides along inside the same MXU push at no extra cost.
            diff = _lrelu(jnp.dot(dlhs, dw[i][...], preferred_element_type=f32)
                          + b_diff[:, :span])
            h = (ow_g * (tmp_in_g + diff)).astype(bf16)
            h = _lrelu(jnp.dot(h, t1w[i][...], preferred_element_type=f32)
                       + b_t1[:, :span]).astype(bf16)
            h = _lrelu(jnp.dot(h, t2w[i][...], preferred_element_type=f32)
                       + b_t2[:, :span])                         # f32 [tb, M*s]
            mg = h[:, :M]
            for j in range(1, s):
                mg = jnp.maximum(mg, h[:, j * M:(j + 1) * M])
            m = mg if m is None else jnp.maximum(m, mg)

        t = (m + tmp_in0).astype(bf16)
        t = _lrelu(jnp.dot(t, w_o1[...], preferred_element_type=f32) + b_o1[...])
        out = jnp.dot(t.astype(bf16), w_o2[...], preferred_element_type=f32)  # [tb, OUT]
        pre0 = xrow[:, :PRE]                                     # f32 skip connection
        out_ref[...] = (out + pre0).astype(out_ref.dtype)

    return kernel


def v2p_finetuner_forward(x, params, d=None, *, tile_b=1024, group=None):
    """Pallas forward pass of V2PFinetuner_v7_1.

    x: [B, K, C] with C = PRE + F + 3 (channels-last, same as the PyTorch input).
    `d` is accepted for signature parity but unused by the reference forward.
    """
    del d  # TODO(synk): the reference module's forward never reads `d`.
    B, k, c = x.shape
    assert k == K and c == C, (x.shape, (K, C))
    assert PRE == OUT, "final `+ pre[:,0,:]` broadcast requires out_channels == pre_channels"

    if group is None:
        group = _default_group()
    sizes = _partition_k(int(group))
    distinct = tuple(sorted(set(sizes), reverse=True))
    gmax = distinct[0]
    bf16 = jnp.bfloat16

    # block-diagonal k-group weights (bf16) + biases tiled to the largest group (f32)
    entry_w = tuple(_entry_group_weight(params, s).astype(bf16) for s in distinct)
    diff_w = tuple(_block_diag(params['w_diff'], s).astype(bf16) for s in distinct)
    t1_w = tuple(_block_diag(params['w_t1'], s).astype(bf16) for s in distinct)
    t2_w = tuple(_block_diag(params['w_t2'], s).astype(bf16) for s in distinct)
    b_in_t = jnp.tile(params['b_in'].astype(jnp.float32), (1, gmax))
    b_off_t = jnp.tile(params['b_off'].astype(jnp.float32), (1, gmax))
    b_diff_t = jnp.tile(params['b_diff'].astype(jnp.float32), (1, gmax))
    b_t1_t = jnp.tile(params['b_t1'].astype(jnp.float32), (1, gmax))
    b_t2_t = jnp.tile(params['b_t2'].astype(jnp.float32), (1, gmax))
    w_o1 = params['w_o1'].astype(bf16)
    b_o1 = params['b_o1'].astype(jnp.float32)
    w_o2 = params['w_o2'].astype(bf16)

    weights = (entry_w + diff_w + t1_w + t2_w
               + (b_in_t, b_off_t, b_diff_t, b_t1_t, b_t2_t, w_o1, b_o1, w_o2))

    # which lanes of a [K*C] row are offset channels (get tanh'ed in-kernel)
    lane_mask = jnp.tile(
        jnp.concatenate([jnp.zeros((PRE + F,), jnp.float32),
                         jnp.ones((3,), jnp.float32)]), (K,)).reshape(1, K * C)

    # dense per-row layout: [B, K*C] (free, contiguous reshape)
    x2 = x.reshape(B, K * C)

    # batch tiling: multiples of 16 (bf16-clean sublanes); cap so the grid has >=2
    # parallel tiles when possible, so both v7x TensorCores get work.
    tile_b = max(16, (int(tile_b) // 16) * 16)
    two_tile = max(16, (((B + 1) // 2 + 15) // 16) * 16)
    tile_b = min(tile_b, two_tile)
    nb = pl.cdiv(B, tile_b)
    b_pad = nb * tile_b
    if b_pad != B:
        x2 = jnp.pad(x2, ((0, b_pad - B), (0, 0)))   # tail tile padded, sliced off below

    kernel = _make_kernel(sizes, distinct)

    def resident(arr):
        return pl.BlockSpec(arr.shape, lambda i: (0,) * arr.ndim)

    out = pl.pallas_call(
        kernel,
        out_shape=jax.ShapeDtypeStruct((b_pad, OUT), jnp.float32),
        grid=(nb,),
        in_specs=[pl.BlockSpec((tile_b, K * C), lambda i: (i, 0)),
                  resident(lane_mask)] + [resident(w) for w in weights],
        out_specs=pl.BlockSpec((tile_b, OUT), lambda i: (i, 0)),
        compiler_params=pltpu.CompilerParams(
            dimension_semantics=("parallel",),
            vmem_limit_bytes=32 * 1024 * 1024),
    )(x2, lane_mask, *weights)
    return out[:B]


def init_params(key):
    """Deterministic uniform init with PyTorch-Linear-like bounds."""
    ks = jax.random.split(key, 13)

    def u(k, shape, fan_in):
        bound = (1.0 / fan_in) ** 0.5
        return jax.random.uniform(k, shape, jnp.float32, -bound, bound)

    return {
        'w_off': u(ks[0], (3, M), 3),        # out_finetune_mlp_offset Linear(3, M)
        'b_off': u(ks[1], (1, M), 3),
        'w_in':  u(ks[2], (F, M), F),        # out_finetune_mlp_in Linear(F, M)
        'b_in':  u(ks[3], (1, M), F),
        'w_diff': u(ks[4], (M, M), M),       # out_finetune_mlp_diff_tune Linear(M, M)
        'b_diff': u(ks[5], (1, M), M),
        'w_t1':  u(ks[6], (M, M), M),        # out_finetune_mlp_tune Linear(M, M) x2
        'b_t1':  u(ks[7], (1, M), M),
        'w_t2':  u(ks[8], (M, M), M),
        'b_t2':  u(ks[9], (1, M), M),
        'w_o1':  u(ks[10], (M, M), M),       # out_finetune_mlp_out Linear(M, M)
        'b_o1':  u(ks[11], (1, M), M),
        'w_o2':  u(ks[12], (M, OUT), M),     # Linear(M, OUT, bias=False)
    }


def reference_forward_f32(x, params):
    """Pure-JAX f32 reference mirroring the PyTorch V2PFinetuner_v7_1.forward."""
    pre = x[:, :, :PRE]
    feature = x[:, :, PRE:PRE + F]
    offset = x[:, :, PRE + F:]
    offset_w = jnp.tanh(offset)                             # v/z split+cat is a no-op
    tmp_in = _lrelu(feature @ params['w_in'] + params['b_in'])
    ow = jnp.tanh(offset_w @ params['w_off'] + params['b_off'])
    diff = _lrelu((tmp_in - tmp_in[:, :1, :]) @ params['w_diff'] + params['b_diff'])
    h = ow * (tmp_in + diff)
    h = _lrelu(h @ params['w_t1'] + params['b_t1'])
    h = _lrelu(h @ params['w_t2'] + params['b_t2'])
    t = jnp.max(h, axis=1) + tmp_in[:, 0, :]
    t = _lrelu(t @ params['w_o1'] + params['b_o1'])
    return t @ params['w_o2'] + pre[:, 0, :]


def reference_forward_bf16(x, params):
    """Same math but mirroring the kernel numerics: bf16 matmul operands, f32 acc."""
    bf16, f32 = jnp.bfloat16, jnp.float32

    def mm(a, w):
        return jnp.einsum('...i,ij->...j', a.astype(bf16), w.astype(bf16),
                          preferred_element_type=f32)

    pre = x[:, :, :PRE]
    feature = x[:, :, PRE:PRE + F]
    offset = x[:, :, PRE + F:]
    offset_w = jnp.tanh(offset)
    tmp_in = _lrelu(mm(feature, params['w_in']) + params['b_in'])
    ow = jnp.tanh(mm(offset_w, params['w_off']) + params['b_off'])
    diff = _lrelu(mm(tmp_in - tmp_in[:, :1, :], params['w_diff']) + params['b_diff'])
    h = ow * (tmp_in + diff)
    h = _lrelu(mm(h, params['w_t1']) + params['b_t1'])
    h = _lrelu(mm(h, params['w_t2']) + params['b_t2'])
    t = jnp.max(h, axis=1) + tmp_in[:, 0, :]
    t = _lrelu(mm(t, params['w_o1']) + params['b_o1'])
    return mm(t, params['w_o2']) + pre[:, 0, :]


if __name__ == "__main__":
    key = jax.random.PRNGKey(0)
    kx, kd, kp = jax.random.split(key, 3)

    B = 64
    x = jax.random.normal(kx, (B, K, C), dtype=jnp.float32)
    d = jax.random.normal(kd, (B, K, 3), dtype=jnp.float32)   # unused by forward
    params = init_params(kp)

    # multi-tile grid path (4 batch tiles of 16 rows), chip-default k-grouping
    out = jax.block_until_ready(v2p_finetuner_forward(x, params, d, tile_b=16))
    assert out.shape == (B, OUT)
    ref16 = reference_forward_bf16(x, params)
    ref32 = reference_forward_f32(x, params)
    assert jnp.allclose(out, ref16, atol=1e-2, rtol=1e-2), "mismatch vs bf16 reference"
    assert jnp.allclose(out, ref32, atol=6e-2, rtol=6e-2), "mismatch vs f32 reference"

    # ragged batch (pad-and-slice tail) + the other k-group size, so both
    # block-diagonal layouts are exercised regardless of which chip this runs on
    alt_group = 2 if _default_group() == 4 else 4
    out5 = jax.block_until_ready(
        v2p_finetuner_forward(x[:5], params, d[:5], group=alt_group))
    assert out5.shape == (5, OUT)
    assert jnp.allclose(out5, ref16[:5], atol=1e-2, rtol=1e-2), "ragged-batch mismatch"

    print("KERNEL_OK")
</pallas_src>

<mosaic_0001>
module attributes {stable_mosaic.version = 11 : i64} {
  func.func @kernel(%arg0: i32, %arg1: memref<16x258xf32, #tpu.memory_space<vmem>>, %arg2: memref<1x258xf32, #tpu.memory_space<vmem>>, %arg3: memref<172x512xbf16, #tpu.memory_space<vmem>>, %arg4: memref<86x256xbf16, #tpu.memory_space<vmem>>, %arg5: memref<256x256xbf16, #tpu.memory_space<vmem>>, %arg6: memref<128x128xbf16, #tpu.memory_space<vmem>>, %arg7: memref<256x256xbf16, #tpu.memory_space<vmem>>, %arg8: memref<128x128xbf16, #tpu.memory_space<vmem>>, %arg9: memref<256x256xbf16, #tpu.memory_space<vmem>>, %arg10: memref<128x128xbf16, #tpu.memory_space<vmem>>, %arg11: memref<1x256xf32, #tpu.memory_space<vmem>>, %arg12: memref<1x256xf32, #tpu.memory_space<vmem>>, %arg13: memref<1x256xf32, #tpu.memory_space<vmem>>, %arg14: memref<1x256xf32, #tpu.memory_space<vmem>>, %arg15: memref<1x256xf32, #tpu.memory_space<vmem>>, %arg16: memref<64x64xbf16, #tpu.memory_space<vmem>>, %arg17: memref<1x64xf32, #tpu.memory_space<vmem>>, %arg18: memref<64x8xbf16, #tpu.memory_space<vmem>>, %arg19: memref<16x8xf32, #tpu.memory_space<vmem>>) attributes {dimension_semantics = [#tpu.dimension_semantics<parallel>], iteration_bounds = array<i64: 4>, scalar_prefetch = 0 : i64, scratch_operands = 0 : i64, tpu.core_type = #tpu.core_type<tc>, window_params = [{transform_indices = @transform_0, window_bounds = array<i64: 16, 258>}, {pipeline_mode = #tpu.pipeline_mode<synchronous>, transform_indices = @transform_1, window_bounds = array<i64: 1, 258>}, {pipeline_mode = #tpu.pipeline_mode<synchronous>, transform_indices = @transform_2, window_bounds = array<i64: 172, 512>}, {pipeline_mode = #tpu.pipeline_mode<synchronous>, transform_indices = @transform_3, window_bounds = array<i64: 86, 256>}, {pipeline_mode = #tpu.pipeline_mode<synchronous>, transform_indices = @transform_4, window_bounds = array<i64: 256, 256>}, {pipeline_mode = #tpu.pipeline_mode<synchronous>, transform_indices = @transform_5, window_bounds = array<i64: 128, 128>}, {pipeline_mode = #tpu.pipeline_mode<synchronous>, transform_indices = @transform_6, window_bounds = array<i64: 256, 256>}, {pipeline_mode = #tpu.pipeline_mode<synchronous>, transform_indices = @transform_7, window_bounds = array<i64: 128, 128>}, {pipeline_mode = #tpu.pipeline_mode<synchronous>, transform_indices = @transform_8, window_bounds = array<i64: 256, 256>}, {pipeline_mode = #tpu.pipeline_mode<synchronous>, transform_indices = @transform_9, window_bounds = array<i64: 128, 128>}, {pipeline_mode = #tpu.pipeline_mode<synchronous>, transform_indices = @transform_10, window_bounds = array<i64: 1, 256>}, {pipeline_mode = #tpu.pipeline_mode<synchronous>, transform_indices = @transform_11, window_bounds = array<i64: 1, 256>}, {pipeline_mode = #tpu.pipeline_mode<synchronous>, transform_indices = @transform_12, window_bounds = array<i64: 1, 256>}, {pipeline_mode = #tpu.pipeline_mode<synchronous>, transform_indices = @transform_13, window_bounds = array<i64: 1, 256>}, {pipeline_mode = #tpu.pipeline_mode<synchronous>, transform_indices = @transform_14, window_bounds = array<i64: 1, 256>}, {pipeline_mode = #tpu.pipeline_mode<synchronous>, transform_indices = @transform_15, window_bounds = array<i64: 64, 64>}, {pipeline_mode = #tpu.pipeline_mode<synchronous>, transform_indices = @transform_16, window_bounds = array<i64: 1, 64>}, {pipeline_mode = #tpu.pipeline_mode<synchronous>, transform_indices = @transform_17, window_bounds = array<i64: 64, 8>}, {transform_indices = @transform_18, window_bounds = array<i64: 16, 8>}]} {
    %c0 = arith.constant 0 : index
    %c0_0 = arith.constant 0 : index
    %0 = vector.load %arg1[%c0, %c0_0] : memref<16x258xf32, #tpu.memory_space<vmem>>, vector<16x258xf32>
    %c0_1 = arith.constant 0 : index
    %c0_2 = arith.constant 0 : index
    %1 = vector.load %arg2[%c0_1, %c0_2] : memref<1x258xf32, #tpu.memory_space<vmem>>, vector<1x258xf32>
    %cst = arith.constant 0.000000e+00 : f32
    %2 = vector.broadcast %cst : f32 to vector<1x258xf32>
    %3 = arith.cmpf one, %1, %2 : vector<1x258xf32>
    %4 = math.tanh %0 : vector<16x258xf32>
    %5 = vector.shape_cast %3 : vector<1x258xi1> to vector<1x258xi1>
    %6 = vector.broadcast %5 : vector<1x258xi1> to vector<16x258xi1>
    %7 = arith.select %6, %4, %0 : vector<16x258xi1>, vector<16x258xf32>
    %8 = arith.truncf %7 : vector<16x258xf32> to vector<16x258xbf16>
    %c0_3 = arith.constant 0 : index
    %c0_4 = arith.constant 0 : index
    %9 = vector.load %arg11[%c0_3, %c0_4] : memref<1x256xf32, #tpu.memory_space<vmem>>, vector<1x256xf32>
    %c0_5 = arith.constant 0 : index
    %c0_6 = arith.constant 0 : index
    %10 = vector.load %arg12[%c0_5, %c0_6] : memref<1x256xf32, #tpu.memory_space<vmem>>, vector<1x256xf32>
    %c0_7 = arith.constant 0 : index
    %c0_8 = arith.constant 0 : index
    %11 = vector.load %arg13[%c0_7, %c0_8] : memref<1x256xf32, #tpu.memory_space<vmem>>, vector<1x256xf32>
    %c0_9 = arith.constant 0 : index
    %c0_10 = arith.constant 0 : index
    %12 = vector.load %arg14[%c0_9, %c0_10] : memref<1x256xf32, #tpu.memory_space<vmem>>, vector<1x256xf32>
    %c0_11 = arith.constant 0 : index
    %c0_12 = arith.constant 0 : index
    %13 = vector.load %arg15[%c0_11, %c0_12] : memref<1x256xf32, #tpu.memory_space<vmem>>, vector<1x256xf32>
    %14 = vector.extract_strided_slice %8 {offsets = [0, 0], sizes = [16, 172], strides = [1, 1]} : vector<16x258xbf16> to vector<16x172xbf16>
    %c0_13 = arith.constant 0 : index
    %c0_14 = arith.constant 0 : index
    %15 = vector.load %arg3[%c0_13, %c0_14] : memref<172x512xbf16, #tpu.memory_space<vmem>>, vector<172x512xbf16>
    %cst_15 = arith.constant dense<0.000000e+00> : vector<16x512xf32>
    %16 = tpu.matmul %14, %15, %cst_15 {dimension_numbers = #tpu.dot_dimension_numbers<[1], [0], [0], [1], [0, 0, 1, 1], [], []>} : vector<16x172xbf16>, vector<172x512xbf16>, vector<16x512xf32> -> vector<16x512xf32>
    %17 = vector.extract_strided_slice %16 {offsets = [0, 0], sizes = [16, 256], strides = [1, 1]} : vector<16x512xf32> to vector<16x256xf32>
    %18 = vector.broadcast %9 : vector<1x256xf32> to vector<16x256xf32>
    %19 = arith.addf %17, %18 : vector<16x256xf32>
    %cst_16 = arith.constant 0.00999999977 : f32
    %20 = vector.broadcast %cst_16 : f32 to vector<16x256xf32>
    %21 = arith.mulf %20, %19 : vector<16x256xf32>
    %22 = arith.maximumf %19, %21 : vector<16x256xf32>
    %23 = vector.extract_strided_slice %16 {offsets = [0, 256], sizes = [16, 256], strides = [1, 1]} : vector<16x512xf32> to vector<16x256xf32>
    %24 = vector.broadcast %10 : vector<1x256xf32> to vector<16x256xf32>
    %25 = arith.addf %23, %24 : vector<16x256xf32>
    %26 = math.tanh %25 : vector<16x256xf32>
    %27 = vector.extract_strided_slice %22 {offsets = [0, 0], sizes = [16, 64], strides = [1, 1]} : vector<16x256xf32> to vector<16x64xf32>
    %28 = tpu.concatenate %27, %27, %27, %27 in 1 : vector<16x64xf32>, vector<16x64xf32>, vector<16x64xf32>, vector<16x64xf32> -> vector<16x256xf32>
    %29 = arith.subf %22, %28 : vector<16x256xf32>
    %30 = arith.truncf %29 : vector<16x256xf32> to vector<16x256xbf16>
    %c0_17 = arith.constant 0 : index
    %c0_18 = arith.constant 0 : index
    %31 = vector.load %arg5[%c0_17, %c0_18] : memref<256x256xbf16, #tpu.memory_space<vmem>>, vector<256x256xbf16>
    %cst_19 = arith.constant dense<0.000000e+00> : vector<16x256xf32>
    %32 = tpu.matmul %30, %31, %cst_19 {dimension_numbers = #tpu.dot_dimension_numbers<[1], [0], [0], [1], [0, 0, 1, 1], [], []>} : vector<16x256xbf16>, vector<256x256xbf16>, vector<16x256xf32> -> vector<16x256xf32>
    %33 = vector.broadcast %11 : vector<1x256xf32> to vector<16x256xf32>
    %34 = arith.addf %32, %33 : vector<16x256xf32>
    %cst_20 = arith.constant 0.00999999977 : f32
    %35 = vector.broadcast %cst_20 : f32 to vector<16x256xf32>
    %36 = arith.mulf %35, %34 : vector<16x256xf32>
    %37 = arith.maximumf %34, %36 : vector<16x256xf32>
    %38 = arith.addf %22, %37 : vector<16x256xf32>
    %39 = arith.mulf %26, %38 : vector<16x256xf32>
    %40 = arith.truncf %39 : vector<16x256xf32> to vector<16x256xbf16>
    %c0_21 = arith.constant 0 : index
    %c0_22 = arith.constant 0 : index
    %41 = vector.load %arg7[%c0_21, %c0_22] : memref<256x256xbf16, #tpu.memory_space<vmem>>, vector<256x256xbf16>
    %cst_23 = arith.constant dense<0.000000e+00> : vector<16x256xf32>
    %42 = tpu.matmul %40, %41, %cst_23 {dimension_numbers = #tpu.dot_dimension_numbers<[1], [0], [0], [1], [0, 0, 1, 1], [], []>} : vector<16x256xbf16>, vector<256x256xbf16>, vector<16x256xf32> -> vector<16x256xf32>
    %43 = vector.broadcast %12 : vector<1x256xf32> to vector<16x256xf32>
    %44 = arith.addf %42, %43 : vector<16x256xf32>
    %cst_24 = arith.constant 0.00999999977 : f32
    %45 = vector.broadcast %cst_24 : f32 to vector<16x256xf32>
    %46 = arith.mulf %45, %44 : vector<16x256xf32>
    %47 = arith.maximumf %44, %46 : vector<16x256xf32>
    %48 = arith.truncf %47 : vector<16x256xf32> to vector<16x256xbf16>
    %c0_25 = arith.constant 0 : index
    %c0_26 = arith.constant 0 : index
    %49 = vector.load %arg9[%c0_25, %c0_26] : memref<256x256xbf16, #tpu.memory_space<vmem>>, vector<256x256xbf16>
    %cst_27 = arith.constant dense<0.000000e+00> : vector<16x256xf32>
    %50 = tpu.matmul %48, %49, %cst_27 {dimension_numbers = #tpu.dot_dimension_numbers<[1], [0], [0], [1], [0, 0, 1, 1], [], []>} : vector<16x256xbf16>, vector<256x256xbf16>, vector<16x256xf32> -> vector<16x256xf32>
    %51 = vector.broadcast %13 : vector<1x256xf32> to vector<16x256xf32>
    %52 = arith.addf %50, %51 : vector<16x256xf32>
    %cst_28 = arith.constant 0.00999999977 : f32
    %53 = vector.broadcast %cst_28 : f32 to vector<16x256xf32>
    %54 = arith.mulf %53, %52 : vector<16x256xf32>
    %55 = arith.maximumf %52, %54 : vector<16x256xf32>
    %56 = vector.extract_strided_slice %55 {offsets = [0, 0], sizes = [16, 64], strides = [1, 1]} : vector<16x256xf32> to vector<16x64xf32>
    %57 = vector.extract_strided_slice %55 {offsets = [0, 64], sizes = [16, 64], strides = [1, 1]} : vector<16x256xf32> to vector<16x64xf32>
    %58 = arith.maximumf %56, %57 : vector<16x64xf32>
    %59 = vector.extract_strided_slice %55 {offsets = [0, 128], sizes = [16, 64], strides = [1, 1]} : vector<16x256xf32> to vector<16x64xf32>
    %60 = arith.maximumf %58, %59 : vector<16x64xf32>
    %61 = vector.extract_strided_slice %55 {offsets = [0, 192], sizes = [16, 64], strides = [1, 1]} : vector<16x256xf32> to vector<16x64xf32>
    %62 = arith.maximumf %60, %61 : vector<16x64xf32>
    %63 = vector.extract_strided_slice %8 {offsets = [0, 172], sizes = [16, 86], strides = [1, 1]} : vector<16x258xbf16> to vector<16x86xbf16>
    %c0_29 = arith.constant 0 : index
    %c0_30 = arith.constant 0 : index
    %64 = vector.load %arg4[%c0_29, %c0_30] : memref<86x256xbf16, #tpu.memory_space<vmem>>, vector<86x256xbf16>
    %cst_31 = arith.constant dense<0.000000e+00> : vector<16x256xf32>
    %65 = tpu.matmul %63, %64, %cst_31 {dimension_numbers = #tpu.dot_dimension_numbers<[1], [0], [0], [1], [0, 0, 1, 1], [], []>} : vector<16x86xbf16>, vector<86x256xbf16>, vector<16x256xf32> -> vector<16x256xf32>
    %66 = vector.extract_strided_slice %65 {offsets = [0, 0], sizes = [16, 128], strides = [1, 1]} : vector<16x256xf32> to vector<16x128xf32>
    %67 = vector.extract_strided_slice %9 {offsets = [0, 0], sizes = [1, 128], strides = [1, 1]} : vector<1x256xf32> to vector<1x128xf32>
    %68 = vector.broadcast %67 : vector<1x128xf32> to vector<16x128xf32>
    %69 = arith.addf %66, %68 : vector<16x128xf32>
    %cst_32 = arith.constant 0.00999999977 : f32
    %70 = vector.broadcast %cst_32 : f32 to vector<16x128xf32>
    %71 = arith.mulf %70, %69 : vector<16x128xf32>
    %72 = arith.maximumf %69, %71 : vector<16x128xf32>
    %73 = vector.extract_strided_slice %65 {offsets = [0, 128], sizes = [16, 128], strides = [1, 1]} : vector<16x256xf32> to vector<16x128xf32>
    %74 = vector.extract_strided_slice %10 {offsets = [0, 0], sizes = [1, 128], strides = [1, 1]} : vector<1x256xf32> to vector<1x128xf32>
    %75 = vector.broadcast %74 : vector<1x128xf32> to vector<16x128xf32>
    %76 = arith.addf %73, %75 : vector<16x128xf32>
    %77 = math.tanh %76 : vector<16x128xf32>
    %78 = tpu.concatenate %27, %27 in 1 : vector<16x64xf32>, vector<16x64xf32> -> vector<16x128xf32>
    %79 = arith.subf %72, %78 : vector<16x128xf32>
    %80 = arith.truncf %79 : vector<16x128xf32> to vector<16x128xbf16>
    %c0_33 = arith.constant 0 : index
    %c0_34 = arith.constant 0 : index
    %81 = vector.load %arg6[%c0_33, %c0_34] : memref<128x128xbf16, #tpu.memory_space<vmem>>, vector<128x128xbf16>
    %cst_35 = arith.constant dense<0.000000e+00> : vector<16x128xf32>
    %82 = tpu.matmul %80, %81, %cst_35 {dimension_numbers = #tpu.dot_dimension_numbers<[1], [0], [0], [1], [0, 0, 1, 1], [], []>} : vector<16x128xbf16>, vector<128x128xbf16>, vector<16x128xf32> -> vector<16x128xf32>
    %83 = vector.extract_strided_slice %11 {offsets = [0, 0], sizes = [1, 128], strides = [1, 1]} : vector<1x256xf32> to vector<1x128xf32>
    %84 = vector.broadcast %83 : vector<1x128xf32> to vector<16x128xf32>
    %85 = arith.addf %82, %84 : vector<16x128xf32>
    %cst_36 = arith.constant 0.00999999977 : f32
    %86 = vector.broadcast %cst_36 : f32 to vector<16x128xf32>
    %87 = arith.mulf %86, %85 : vector<16x128xf32>
    %88 = arith.maximumf %85, %87 : vector<16x128xf32>
    %89 = arith.addf %72, %88 : vector<16x128xf32>
    %90 = arith.mulf %77, %89 : vector<16x128xf32>
    %91 = arith.truncf %90 : vector<16x128xf32> to vector<16x128xbf16>
    %c0_37 = arith.constant 0 : index
    %c0_38 = arith.constant 0 : index
    %92 = vector.load %arg8[%c0_37, %c0_38] : memref<128x128xbf16, #tpu.memory_space<vmem>>, vector<128x128xbf16>
    %cst_39 = arith.constant dense<0.000000e+00> : vector<16x128xf32>
    %93 = tpu.matmul %91, %92, %cst_39 {dimension_numbers = #tpu.dot_dimension_numbers<[1], [0], [0], [1], [0, 0, 1, 1], [], []>} : vector<16x128xbf16>, vector<128x128xbf16>, vector<16x128xf32> -> vector<16x128xf32>
    %94 = vector.extract_strided_slice %12 {offsets = [0, 0], sizes = [1, 128], strides = [1, 1]} : vector<1x256xf32> to vector<1x128xf32>
    %95 = vector.broadcast %94 : vector<1x128xf32> to vector<16x128xf32>
    %96 = arith.addf %93, %95 : vector<16x128xf32>
    %cst_40 = arith.constant 0.00999999977 : f32
    %97 = vector.broadcast %cst_40 : f32 to vector<16x128xf32>
    %98 = arith.mulf %97, %96 : vector<16x128xf32>
    %99 = arith.maximumf %96, %98 : vector<16x128xf32>
    %100 = arith.truncf %99 : vector<16x128xf32> to vector<16x128xbf16>
    %c0_41 = arith.constant 0 : index
    %c0_42 = arith.constant 0 : index
    %101 = vector.load %arg10[%c0_41, %c0_42] : memref<128x128xbf16, #tpu.memory_space<vmem>>, vector<128x128xbf16>
    %cst_43 = arith.constant dense<0.000000e+00> : vector<16x128xf32>
    %102 = tpu.matmul %100, %101, %cst_43 {dimension_numbers = #tpu.dot_dimension_numbers<[1], [0], [0], [1], [0, 0, 1, 1], [], []>} : vector<16x128xbf16>, vector<128x128xbf16>, vector<16x128xf32> -> vector<16x128xf32>
    %103 = vector.extract_strided_slice %13 {offsets = [0, 0], sizes = [1, 128], strides = [1, 1]} : vector<1x256xf32> to vector<1x128xf32>
    %104 = vector.broadcast %103 : vector<1x128xf32> to vector<16x128xf32>
    %105 = arith.addf %102, %104 : vector<16x128xf32>
    %cst_44 = arith.constant 0.00999999977 : f32
    %106 = vector.broadcast %cst_44 : f32 to vector<16x128xf32>
    %107 = arith.mulf %106, %105 : vector<16x128xf32>
    %108 = arith.maximumf %105, %107 : vector<16x128xf32>
    %109 = vector.extract_strided_slice %108 {offsets = [0, 0], sizes = [16, 64], strides = [1, 1]} : vector<16x128xf32> to vector<16x64xf32>
    %110 = vector.extract_strided_slice %108 {offsets = [0, 64], sizes = [16, 64], strides = [1, 1]} : vector<16x128xf32> to vector<16x64xf32>
    %111 = arith.maximumf %109, %110 : vector<16x64xf32>
    %112 = arith.maximumf %62, %111 : vector<16x64xf32>
    %113 = arith.addf %112, %27 : vector<16x64xf32>
    %114 = arith.truncf %113 : vector<16x64xf32> to vector<16x64xbf16>
    %c0_45 = arith.constant 0 : index
    %c0_46 = arith.constant 0 : index
    %115 = vector.load %arg16[%c0_45, %c0_46] : memref<64x64xbf16, #tpu.memory_space<vmem>>, vector<64x64xbf16>
    %cst_47 = arith.constant dense<0.000000e+00> : vector<16x64xf32>
    %116 = tpu.matmul %114, %115, %cst_47 {dimension_numbers = #tpu.dot_dimension_numbers<[1], [0], [0], [1], [0, 0, 1, 1], [], []>} : vector<16x64xbf16>, vector<64x64xbf16>, vector<16x64xf32> -> vector<16x64xf32>
    %c0_48 = arith.constant 0 : index
    %c0_49 = arith.constant 0 : index
    %117 = vector.load %arg17[%c0_48, %c0_49] : memref<1x64xf32, #tpu.memory_space<vmem>>, vector<1x64xf32>
    %118 = vector.broadcast %117 : vector<1x64xf32> to vector<16x64xf32>
    %119 = arith.addf %116, %118 : vector<16x64xf32>
    %cst_50 = arith.constant 0.00999999977 : f32
    %120 = vector.broadcast %cst_50 : f32 to vector<16x64xf32>
    %121 = arith.mulf %120, %119 : vector<16x64xf32>
    %122 = arith.maximumf %119, %121 : vector<16x64xf32>
    %123 = arith.truncf %122 : vector<16x64xf32> to vector<16x64xbf16>
    %c0_51 = arith.constant 0 : index
    %c0_52 = arith.constant 0 : index
    %124 = vector.load %arg18[%c0_51, %c0_52] : memref<64x8xbf16, #tpu.memory_space<vmem>>, vector<64x8xbf16>
    %cst_53 = arith.constant dense<0.000000e+00> : vector<16x8xf32>
    %125 = tpu.matmul %123, %124, %cst_53 {dimension_numbers = #tpu.dot_dimension_numbers<[1], [0], [0], [1], [0, 0, 1, 1], [], []>} : vector<16x64xbf16>, vector<64x8xbf16>, vector<16x8xf32> -> vector<16x8xf32>
    %126 = vector.extract_strided_slice %0 {offsets = [0, 0], sizes = [16, 8], strides = [1, 1]} : vector<16x258xf32> to vector<16x8xf32>
    %127 = arith.addf %125, %126 : vector<16x8xf32>
    %c0_54 = arith.constant 0 : index
    %c0_55 = arith.constant 0 : index
    %128 = vector.load %arg19[%c0_54, %c0_55] : memref<16x8xf32, #tpu.memory_space<vmem>>, vector<16x8xf32>
    tpu.vector_store %arg19[%c0_54, %c0_55], %127 {strides = array<i32>} : memref<16x8xf32, #tpu.memory_space<vmem>>, vector<16x8xf32>,
    return
  }
  func.func @transform_0(%arg0: i32) -> (i32, i32) {
    %c0_i32 = arith.constant 0 : i32
    %c0_i32_0 = arith.constant 0 : i32
    return %arg0, %c0_i32 : i32, i32
  }
  func.func @transform_1(%arg0: i32) -> (i32, i32) {
    %c0_i32 = arith.constant 0 : i32
    %c0_i32_0 = arith.constant 0 : i32
    %c0_i32_1 = arith.constant 0 : i32
    return %c0_i32, %c0_i32_0 : i32, i32
  }
  func.func @transform_2(%arg0: i32) -> (i32, i32) {
    %c0_i32 = arith.constant 0 : i32
    %c0_i32_0 = arith.constant 0 : i32
    %c0_i32_1 = arith.constant 0 : i32
    return %c0_i32, %c0_i32_0 : i32, i32
  }
  func.func @transform_3(%arg0: i32) -> (i32, i32) {
    %c0_i32 = arith.constant 0 : i32
    %c0_i32_0 = arith.constant 0 : i32
    %c0_i32_1 = arith.constant 0 : i32
    return %c0_i32, %c0_i32_0 : i32, i32
  }
  func.func @transform_4(%arg0: i32) -> (i32, i32) {
    %c0_i32 = arith.constant 0 : i32
    %c0_i32_0 = arith.constant 0 : i32
    %c0_i32_1 = arith.constant 0 : i32
    return %c0_i32, %c0_i32_0 : i32, i32
  }
  func.func @transform_5(%arg0: i32) -> (i32, i32) {
    %c0_i32 = arith.constant 0 : i32
    %c0_i32_0 = arith.constant 0 : i32
    %c0_i32_1 = arith.constant 0 : i32
    return %c0_i32, %c0_i32_0 : i32, i32
  }
  func.func @transform_6(%arg0: i32) -> (i32, i32) {
    %c0_i32 = arith.constant 0 : i32
    %c0_i32_0 = arith.constant 0 : i32
    %c0_i32_1 = arith.constant 0 : i32
    return %c0_i32, %c0_i32_0 : i32, i32
  }
  func.func @transform_7(%arg0: i32) -> (i32, i32) {
    %c0_i32 = arith.constant 0 : i32
    %c0_i32_0 = arith.constant 0 : i32
    %c0_i32_1 = arith.constant 0 : i32
    return %c0_i32, %c0_i32_0 : i32, i32
  }
  func.func @transform_8(%arg0: i32) -> (i32, i32) {
    %c0_i32 = arith.constant 0 : i32
    %c0_i32_0 = arith.constant 0 : i32
    %c0_i32_1 = arith.constant 0 : i32
    return %c0_i32, %c0_i32_0 : i32, i32
  }
  func.func @transform_9(%arg0: i32) -> (i32, i32) {
    %c0_i32 = arith.constant 0 : i32
    %c0_i32_0 = arith.constant 0 : i32
    %c0_i32_1 = arith.constant 0 : i32
    return %c0_i32, %c0_i32_0 : i32, i32
  }
  func.func @transform_10(%arg0: i32) -> (i32, i32) {
    %c0_i32 = arith.constant 0 : i32
    %c0_i32_0 = arith.constant 0 : i32
    %c0_i32_1 = arith.constant 0 : i32
    return %c0_i32, %c0_i32_0 : i32, i32
  }
  func.func @transform_11(%arg0: i32) -> (i32, i32) {
    %c0_i32 = arith.constant 0 : i32
    %c0_i32_0 = arith.constant 0 : i32
    %c0_i32_1 = arith.constant 0 : i32
    return %c0_i32, %c0_i32_0 : i32, i32
  }
  func.func @transform_12(%arg0: i32) -> (i32, i32) {
    %c0_i32 = arith.constant 0 : i32
    %c0_i32_0 = arith.constant 0 : i32
    %c0_i32_1 = arith.constant 0 : i32
    return %c0_i32, %c0_i32_0 : i32, i32
  }
  func.func @transform_13(%arg0: i32) -> (i32, i32) {
    %c0_i32 = arith.constant 0 : i32
    %c0_i32_0 = arith.constant 0 : i32
    %c0_i32_1 = arith.constant 0 : i32
    return %c0_i32, %c0_i32_0 : i32, i32
  }
  func.func @transform_14(%arg0: i32) -> (i32, i32) {
    %c0_i32 = arith.constant 0 : i32
    %c0_i32_0 = arith.constant 0 : i32
    %c0_i32_1 = arith.constant 0 : i32
    return %c0_i32, %c0_i32_0 : i32, i32
  }
  func.func @transform_15(%arg0: i32) -> (i32, i32) {
    %c0_i32 = arith.constant 0 : i32
    %c0_i32_0 = arith.constant 0 : i32
    %c0_i32_1 = arith.constant 0 : i32
    return %c0_i32, %c0_i32_0 : i32, i32
  }
  func.func @transform_16(%arg0: i32) -> (i32, i32) {
    %c0_i32 = arith.constant 0 : i32
    %c0_i32_0 = arith.constant 0 : i32
    %c0_i32_1 = arith.constant 0 : i32
    return %c0_i32, %c0_i32_0 : i32, i32
  }
  func.func @transform_17(%arg0: i32) -> (i32, i32) {
    %c0_i32 = arith.constant 0 : i32
    %c0_i32_0 = arith.constant 0 : i32
    %c0_i32_1 = arith.constant 0 : i32
    return %c0_i32, %c0_i32_0 : i32, i32
  }
  func.func @transform_18(%arg0: i32) -> (i32, i32) {
    %c0_i32 = arith.constant 0 : i32
    %c0_i32_0 = arith.constant 0 : i32
    return %arg0, %c0_i32 : i32, i32
  }
}

</mosaic_0001>

<llo_original>
// kernel: tpu_custom_call.1
$region0: #{tpu_custom_call.1}
  #allocation0 [shape = 'u32[]', space=smem, size = 0x4, offset = 0x4, fixed_abs, tag = 'smem constant byte address 0x4 - core index']
  #allocation1 [shape = 'u32[72,128]{1,0:T(1,128)}', space=vmem, size = 0x9000, scoped, tag = 'internal scratch']
  %s0 = inlined_call_operand.hbm [shape: f32[64,258], index: 0, kind: input, shape index: {}]
  %s1 = inlined_call_operand.vmem [shape: f32[1,258], index: 1, kind: input, shape index: {}]
  %s2 = inlined_call_operand.hbm [shape: bf16[172,512], index: 2, kind: input, shape index: {}]
  %s3 = inlined_call_operand.hbm [shape: bf16[86,256], index: 3, kind: input, shape index: {}]
  %s4 = inlined_call_operand.hbm [shape: bf16[256,256], index: 4, kind: input, shape index: {}]
  %s5 = inlined_call_operand.hbm [shape: bf16[128,128], index: 5, kind: input, shape index: {}]
  %s6 = inlined_call_operand.hbm [shape: bf16[256,256], index: 6, kind: input, shape index: {}]
  %s7 = inlined_call_operand.hbm [shape: bf16[128,128], index: 7, kind: input, shape index: {}]
  %s8 = inlined_call_operand.hbm [shape: bf16[256,256], index: 8, kind: input, shape index: {}]
  %s9 = inlined_call_operand.hbm [shape: bf16[128,128], index: 9, kind: input, shape index: {}]
  %s10 = inlined_call_operand.vmem [shape: f32[1,256], index: 10, kind: input, shape index: {}]
  %s11 = inlined_call_operand.vmem [shape: f32[1,256], index: 11, kind: input, shape index: {}]
  %s12 = inlined_call_operand.vmem [shape: f32[1,256], index: 12, kind: input, shape index: {}]
  %s13 = inlined_call_operand.vmem [shape: f32[1,256], index: 13, kind: input, shape index: {}]
  %s14 = inlined_call_operand.vmem [shape: f32[1,256], index: 14, kind: input, shape index: {}]
  %s15 = inlined_call_operand.vmem [shape: bf16[64,64], index: 15, kind: input, shape index: {}]
  %s16 = inlined_call_operand.vmem [shape: f32[1,64], index: 16, kind: input, shape index: {}]
  %s17 = inlined_call_operand.vmem [shape: bf16[64,8], index: 17, kind: input, shape index: {}]
  %s18 = inlined_call_operand.vmem [shape: f32[64,8], index: 18, kind: output, shape index: {}]
  %s19 = sld [smem:[#allocation0]]
  $region141: #{tpu_custom_call.1} parent=0
    _
  %s21 = ssub.s32 1, %s19
  %s22 = scalar_select 0, %s21, %s19
  $region1: #{tpu_custom_call.1} parent=0
    #allocation2 [shape = 'u8[49152]{0}', space=vmem, size = 0xc000, scoped, tag = 'input window, operand 0']
    #allocation3 [shape = 's32[2]{0}', space=sflag, size = 0x8, scoped, tag = 'scoped memory for tpu_custom_call.1']
    #allocation4 [shape = 'u8[180224]{0}', space=vmem, size = 0x2c000, scoped, tag = 'input window, operand 2, single buffered']
    #allocation5 [shape = 's32[1]{0}', space=sflag, size = 0x4, scoped, tag = 'scoped memory for tpu_custom_call.1']
    #allocation6 [shape = 'u8[45056]{0}', space=vmem, size = 0xb000, scoped, tag = 'input window, operand 3, single buffered']
    #allocation7 [shape = 'u8[131072]{0}', space=vmem, size = 0x20000, scoped, tag = 'input window, operand 4, single buffered']
    #allocation8 [shape = 's32[1]{0}', space=sflag, size = 0x4, scoped, tag = 'scoped memory for tpu_custom_call.1']
    #allocation9 [shape = 'u8[32768]{0}', space=vmem, size = 0x8000, scoped, tag = 'input window, operand 5, single buffered']
    #allocation10 [shape = 'u8[131072]{0}', space=vmem, size = 0x20000, scoped, tag = 'input window, operand 6, single buffered']
    #allocation11 [shape = 's32[1]{0}', space=sflag, size = 0x4, scoped, tag = 'scoped memory for tpu_custom_call.1']
    #allocation12 [shape = 'u8[32768]{0}', space=vmem, size = 0x8000, scoped, tag = 'input window, operand 7, single buffered']
    #allocation13 [shape = 'u8[131072]{0}', space=vmem, size = 0x20000, scoped, tag = 'input window, operand 8, single buffered']
    #allocation14 [shape = 's32[1]{0}', space=sflag, size = 0x4, scoped, tag = 'scoped memory for tpu_custom_call.1']
    #allocation15 [shape = 'u8[32768]{0}', space=vmem, size = 0x8000, scoped, tag = 'input window, operand 9, single buffered']
    %23 = vsyncpa [#allocation3], 0
    %s24 = scalar_lea.sflag [#allocation3], 1
    %25 = vsyncpa %s24, 0
    %26 = vsyncpa [#allocation5], 0
    %27 = vsyncpa [#allocation8], 0
    %28 = vsyncpa [#allocation11], 0
    %29 = vsyncpa [#allocation14], 0
    loop: start=0, step=1, limit=6
    $region2: #{tpu_custom_call.1} parent=1 // loop_pre_header
      _
    $region3: #{tpu_custom_call.1} parent=1 // loop_header
      %s31 = sphi 0, %s35
      %p32 = scmp.ge.s32.totalorder %s31, 6
      %s41 = sphi 0, %s43
      %s44 = sphi 0, %s41
      %s45 = sphi 0, %s44
      %s61 = sphi 0, %s45
      %s65 = sphi 0, %s65
      %s67 = sphi 0, %s65
      %s68 = sphi 0, %s67
      %s82 = sphi 0, %s68
      %s86 = sphi 0, %s86
      %s88 = sphi 0, %s86
      %s89 = sphi 0, %s88
      %s103 = sphi 0, %s89
      %s107 = sphi 0, %s107
      %s109 = sphi 0, %s107
      %s110 = sphi 0, %s109
      %s124 = sphi 0, %s110
      %s128 = sphi 0, %s128
      %s130 = sphi 0, %s128
      %s131 = sphi 0, %s130
      %s145 = sphi 0, %s131
      %s149 = sphi 0, %s149
      %s151 = sphi 0, %s149
      %s152 = sphi 0, %s151
      %s166 = sphi 0, %s152
      %s170 = sphi 0, %s170
      %s172 = sphi 0, %s170
      %s173 = sphi 0, %s172
      %s187 = sphi 0, %s173
      %s191 = sphi 0, %s191
      %s193 = sphi 0, %s191
      %s194 = sphi 0, %s193
      %s208 = sphi 0, %s194
      %s212 = sphi 0, %s212
      %s214 = sphi 0, %s212
      %s215 = sphi 0, %s214
      %s229 = sphi 0, %s215
      %s233 = sphi 0, %s233
      %s235 = sphi 0, %s233
      %s236 = sphi 0, %s235
      %s250 = sphi 0, %s236
      %s254 = sphi 0, %s254
      %s256 = sphi 0, %s254
      %s257 = sphi 0, %s256
      %s271 = sphi 0, %s257
      %s275 = sphi 0, %s275
      %s277 = sphi 0, %s275
      %s278 = sphi 0, %s277
      %s292 = sphi 0, %s278
      %s296 = sphi 0, %s296
      %s298 = sphi 0, %s296
      %s299 = sphi 0, %s298
      %s313 = sphi 0, %s299
      %s317 = sphi 0, %s317
      %s319 = sphi 0, %s317
      %s320 = sphi 0, %s319
      %s334 = sphi 0, %s320
      %s338 = sphi 0, %s338
      %s340 = sphi 0, %s338
      %s341 = sphi 0, %s340
      %s355 = sphi 0, %s341
      %s359 = sphi 0, %s359
      %s361 = sphi 0, %s359
      %s362 = sphi 0, %s361
      %s376 = sphi 0, %s362
      %s380 = sphi 0, %s380
      %s382 = sphi 0, %s380
      %s383 = sphi 0, %s382
      %s397 = sphi 0, %s383
      %s401 = sphi 0, %s401
      %s403 = sphi 0, %s401
      %s404 = sphi 0, %s403
      %s418 = sphi 0, %s404
      %s424 = sphi 0, %s426
      %s427 = sphi 0, %s424
      %s428 = sphi 0, %s427
      %s444 = sphi 0, %s428
    $region4: #{tpu_custom_call.1} parent=1 // loop_header_branch
      %34 = sbr.rel (%p32) target = $region8
    $region5: #{tpu_custom_call.1} parent=1 // loop_body
      %s36 = ssub.s32 %s31, 1
      %s37 = ssub.s32 %s31, 2
      %s38 = sadd.s32 %s31, 1
      %s39 = ssub.s32 %s31, %s38
      %p40 = scmp.eq.s32.totalorder %s39, 0
      %s42 = sadd.s32 %s41, 1
      %s43 = scalar_select %p40, %s41, %s42
      %p46 = pneg %p40
      %p47 = scmp.eq.s32.totalorder %s31, 3
      %p48 = por %p46, %p47
      %p49 = scmp.ne.s32.totalorder %s41, %s44
      %p50 = scmp.eq.s32.totalorder %s31, 0
      %p51 = por %p49, %p50
      %p52 = scmp.ne.s32.totalorder %s41, %s44
      %p53 = scmp.eq.s32.totalorder %s36, 3
      %p54 = por %p52, %p53
      %p55 = scmp.ne.s32.totalorder %s44, %s45
      %p56 = scmp.eq.s32.totalorder %s36, 0
      %p57 = por %p55, %p56
      %p58 = scmp.ne.s32.totalorder %s44, %s45
      %p59 = scmp.eq.s32.totalorder %s37, 3
      %p60 = por %p58, %p59
      %p62 = scmp.ne.s32.totalorder %s45, %s61
      %p63 = scmp.eq.s32.totalorder %s37, 0
      %p64 = por %p62, %p63
      %s66 = sadd.s32 %s65, 1
      %p69 = scmp.eq.s32.totalorder %s31, 3
      %p70 = scmp.ne.s32.totalorder %s65, %s67
      %p71 = scmp.eq.s32.totalorder %s31, 0
      %p72 = por %p70, %p71
      %p73 = scmp.ne.s32.totalorder %s65, %s67
      %p74 = scmp.eq.s32.totalorder %s36, 3
      %p75 = por %p73, %p74
      %p76 = scmp.ne.s32.totalorder %s67, %s68
      %p77 = scmp.eq.s32.totalorder %s36, 0
      %p78 = por %p76, %p77
      %p79 = scmp.ne.s32.totalorder %s67, %s68
      %p80 = scmp.eq.s32.totalorder %s37, 3
      %p81 = por %p79, %p80
      %p83 = scmp.ne.s32.totalorder %s68, %s82
      %p84 = scmp.eq.s32.totalorder %s37, 0
      %p85 = por %p83, %p84
      %s87 = sadd.s32 %s86, 1
      %p90 = scmp.eq.s32.totalorder %s31, 3
      %p91 = scmp.ne.s32.totalorder %s86, %s88
      %p92 = scmp.eq.s32.totalorder %s31, 0
      %p93 = por %p91, %p92
      %p94 = scmp.ne.s32.totalorder %s86, %s88
      %p95 = scmp.eq.s32.totalorder %s36, 3
      %p96 = por %p94, %p95
      %p97 = scmp.ne.s32.totalorder %s88, %s89
      %p98 = scmp.eq.s32.totalorder %s36, 0
      %p99 = por %p97, %p98
      %p100 = scmp.ne.s32.totalorder %s88, %s89
      %p101 = scmp.eq.s32.totalorder %s37, 3
      %p102 = por %p100, %p101
      %p104 = scmp.ne.s32.totalorder %s89, %s103
      %p105 = scmp.eq.s32.totalorder %s37, 0
      %p106 = por %p104, %p105
      %s108 = sadd.s32 %s107, 1
      %p111 = scmp.eq.s32.totalorder %s31, 3
      %p112 = scmp.ne.s32.totalorder %s107, %s109
      %p113 = scmp.eq.s32.totalorder %s31, 0
      %p114 = por %p112, %p113
      %p115 = scmp.ne.s32.totalorder %s107, %s109
      %p116 = scmp.eq.s32.totalorder %s36, 3
      %p117 = por %p115, %p116
      %p118 = scmp.ne.s32.totalorder %s109, %s110
      %p119 = scmp.eq.s32.totalorder %s36, 0
      %p120 = por %p118, %p119
      %p121 = scmp.ne.s32.totalorder %s109, %s110
      %p122 = scmp.eq.s32.totalorder %s37, 3
      %p123 = por %p121, %p122
      %p125 = scmp.ne.s32.totalorder %s110, %s124
      %p126 = scmp.eq.s32.totalorder %s37, 0
      %p127 = por %p125, %p126
      %s129 = sadd.s32 %s128, 1
      %p132 = scmp.eq.s32.totalorder %s31, 3
      %p133 = scmp.ne.s32.totalorder %s128, %s130
      %p134 = scmp.eq.s32.totalorder %s31, 0
      %p135 = por %p133, %p134
      %p136 = scmp.ne.s32.totalorder %s128, %s130
      %p137 = scmp.eq.s32.totalorder %s36, 3
      %p138 = por %p136, %p137
      %p139 = scmp.ne.s32.totalorder %s130, %s131
      %p140 = scmp.eq.s32.totalorder %s36, 0
      %p141 = por %p139, %p140
      %p142 = scmp.ne.s32.totalorder %s130, %s131
      %p143 = scmp.eq.s32.totalorder %s37, 3
      %p144 = por %p142, %p143
      %p146 = scmp.ne.s32.totalorder %s131, %s145
      %p147 = scmp.eq.s32.totalorder %s37, 0
      %p148 = por %p146, %p147
      %s150 = sadd.s32 %s149, 1
      %p153 = scmp.eq.s32.totalorder %s31, 3
      %p154 = scmp.ne.s32.totalorder %s149, %s151
      %p155 = scmp.eq.s32.totalorder %s31, 0
      %p156 = por %p154, %p155
      %p157 = scmp.ne.s32.totalorder %s149, %s151
      %p158 = scmp.eq.s32.totalorder %s36, 3
      %p159 = por %p157, %p158
      %p160 = scmp.ne.s32.totalorder %s151, %s152
      %p161 = scmp.eq.s32.totalorder %s36, 0
      %p162 = por %p160, %p161
      %p163 = scmp.ne.s32.totalorder %s151, %s152
      %p164 = scmp.eq.s32.totalorder %s37, 3
      %p165 = por %p163, %p164
      %p167 = scmp.ne.s32.totalorder %s152, %s166
      %p168 = scmp.eq.s32.totalorder %s37, 0
      %p169 = por %p167, %p168
      %s171 = sadd.s32 %s170, 1
      %p174 = scmp.eq.s32.totalorder %s31, 3
      %p175 = scmp.ne.s32.totalorder %s170, %s172
      %p176 = scmp.eq.s32.totalorder %s31, 0
      %p177 = por %p175, %p176
      %p178 = scmp.ne.s32.totalorder %s170, %s172
      %p179 = scmp.eq.s32.totalorder %s36, 3
      %p180 = por %p178, %p179
      %p181 = scmp.ne.s32.totalorder %s172, %s173
      %p182 = scmp.eq.s32.totalorder %s36, 0
      %p183 = por %p181, %p182
      %p184 = scmp.ne.s32.totalorder %s172, %s173
      %p185 = scmp.eq.s32.totalorder %s37, 3
      %p186 = por %p184, %p185
      %p188 = scmp.ne.s32.totalorder %s173, %s187
      %p189 = scmp.eq.s32.totalorder %s37, 0
      %p190 = por %p188, %p189
      %s192 = sadd.s32 %s191, 1
      %p195 = scmp.eq.s32.totalorder %s31, 3
      %p196 = scmp.ne.s32.totalorder %s191, %s193
      %p197 = scmp.eq.s32.totalorder %s31, 0
      %p198 = por %p196, %p197
      %p199 = scmp.ne.s32.totalorder %s191, %s193
      %p200 = scmp.eq.s32.totalorder %s36, 3
      %p201 = por %p199, %p200
      %p202 = scmp.ne.s32.totalorder %s193, %s194
      %p203 = scmp.eq.s32.totalorder %s36, 0
      %p204 = por %p202, %p203
      %p205 = scmp.ne.s32.totalorder %s193, %s194
      %p206 = scmp.eq.s32.totalorder %s37, 3
      %p207 = por %p205, %p206
      %p209 = scmp.ne.s32.totalorder %s194, %s208
      %p210 = scmp.eq.s32.totalorder %s37, 0
      %p211 = por %p209, %p210
      %s213 = sadd.s32 %s212, 1
      %p216 = scmp.eq.s32.totalorder %s31, 3
      %p217 = scmp.ne.s32.totalorder %s212, %s214
      %p218 = scmp.eq.s32.totalorder %s31, 0
      %p219 = por %p217, %p218
      %p220 = scmp.ne.s32.totalorder %s212, %s214
      %p221 = scmp.eq.s32.totalorder %s36, 3
      %p222 = por %p220, %p221
      %p223 = scmp.ne.s32.totalorder %s214, %s215
      %p224 = scmp.eq.s32.totalorder %s36, 0
      %p225 = por %p223, %p224
      %p226 = scmp.ne.s32.totalorder %s214, %s215
      %p227 = scmp.eq.s32.totalorder %s37, 3
      %p228 = por %p226, %p227
      %p230 = scmp.ne.s32.totalorder %s215, %s229
      %p231 = scmp.eq.s32.totalorder %s37, 0
      %p232 = por %p230, %p231
      %s234 = sadd.s32 %s233, 1
      %p237 = scmp.eq.s32.totalorder %s31, 3
      %p238 = scmp.ne.s32.totalorder %s233, %s235
      %p239 = scmp.eq.s32.totalorder %s31, 0
      %p240 = por %p238, %p239
      %p241 = scmp.ne.s32.totalorder %s233, %s235
      %p242 = scmp.eq.s32.totalorder %s36, 3
      %p243 = por %p241, %p242
      %p244 = scmp.ne.s32.totalorder %s235, %s236
      %p245 = scmp.eq.s32.totalorder %s36, 0
      %p246 = por %p244, %p245
      %p247 = scmp.ne.s32.totalorder %s235, %s236
      %p248 = scmp.eq.s32.totalorder %s37, 3
      %p249 = por %p247, %p248
      %p251 = scmp.ne.s32.totalorder %s236, %s250
      %p252 = scmp.eq.s32.totalorder %s37, 0
      %p253 = por %p251, %p252
      %s255 = sadd.s32 %s254, 1
      %p258 = scmp.eq.s32.totalorder %s31, 3
      %p259 = scmp.ne.s32.totalorder %s254, %s256
      %p260 = scmp.eq.s32.totalorder %s31, 0
      %p261 = por %p259, %p260
      %p262 = scmp.ne.s32.totalorder %s254, %s256
      %p263 = scmp.eq.s32.totalorder %s36, 3
      %p264 = por %p262, %p263
      %p265 = scmp.ne.s32.totalorder %s256, %s257
      %p266 = scmp.eq.s32.totalorder %s36, 0
      %p267 = por %p265, %p266
      %p268 = scmp.ne.s32.totalorder %s256, %s257
      %p269 = scmp.eq.s32.totalorder %s37, 3
      %p270 = por %p268, %p269
      %p272 = scmp.ne.s32.totalorder %s257, %s271
      %p273 = scmp.eq.s32.totalorder %s37, 0
      %p274 = por %p272, %p273
      %s276 = sadd.s32 %s275, 1
      %p279 = scmp.eq.s32.totalorder %s31, 3
      %p280 = scmp.ne.s32.totalorder %s275, %s277
      %p281 = scmp.eq.s32.totalorder %s31, 0
      %p282 = por %p280, %p281
      %p283 = scmp.ne.s32.totalorder %s275, %s277
      %p284 = scmp.eq.s32.totalorder %s36, 3
      %p285 = por %p283, %p284
      %p286 = scmp.ne.s32.totalorder %s277, %s278
      %p287 = scmp.eq.s32.totalorder %s36, 0
      %p288 = por %p286, %p287
      %p289 = scmp.ne.s32.totalorder %s277, %s278
      %p290 = scmp.eq.s32.totalorder %s37, 3
      %p291 = por %p289, %p290
      %p293 = scmp.ne.s32.totalorder %s278, %s292
      %p294 = scmp.eq.s32.totalorder %s37, 0
      %p295 = por %p293, %p294
      %s297 = sadd.s32 %s296, 1
      %p300 = scmp.eq.s32.totalorder %s31, 3
      %p301 = scmp.ne.s32.totalorder %s296, %s298
      %p302 = scmp.eq.s32.totalorder %s31, 0
      %p303 = por %p301, %p302
      %p304 = scmp.ne.s32.totalorder %s296, %s298
      %p305 = scmp.eq.s32.totalorder %s36, 3
      %p306 = por %p304, %p305
      %p307 = scmp.ne.s32.totalorder %s298, %s299
      %p308 = scmp.eq.s32.totalorder %s36, 0
      %p309 = por %p307, %p308
      %p310 = scmp.ne.s32.totalorder %s298, %s299
      %p311 = scmp.eq.s32.totalorder %s37, 3
      %p312 = por %p310, %p311
      %p314 = scmp.ne.s32.totalorder %s299, %s313
      %p315 = scmp.eq.s32.totalorder %s37, 0
      %p316 = por %p314, %p315
      %s318 = sadd.s32 %s317, 1
      %p321 = scmp.eq.s32.totalorder %s31, 3
      %p322 = scmp.ne.s32.totalorder %s317, %s319
      %p323 = scmp.eq.s32.totalorder %s31, 0
      %p324 = por %p322, %p323
      %p325 = scmp.ne.s32.totalorder %s317, %s319
      %p326 = scmp.eq.s32.totalorder %s36, 3
      %p327 = por %p325, %p326
      %p328 = scmp.ne.s32.totalorder %s319, %s320
      %p329 = scmp.eq.s32.totalorder %s36, 0
      %p330 = por %p328, %p329
      %p331 = scmp.ne.s32.totalorder %s319, %s320
      %p332 = scmp.eq.s32.totalorder %s37, 3
      %p333 = por %p331, %p332
      %p335 = scmp.ne.s32.totalorder %s320, %s334
      %p336 = scmp.eq.s32.totalorder %s37, 0
      %p337 = por %p335, %p336
      %s339 = sadd.s32 %s338, 1
      %p342 = scmp.eq.s32.totalorder %s31, 3
      %p343 = scmp.ne.s32.totalorder %s338, %s340
      %p344 = scmp.eq.s32.totalorder %s31, 0
      %p345 = por %p343, %p344
      %p346 = scmp.ne.s32.totalorder %s338, %s340
      %p347 = scmp.eq.s32.totalorder %s36, 3
      %p348 = por %p346, %p347
      %p349 = scmp.ne.s32.totalorder %s340, %s341
      %p350 = scmp.eq.s32.totalorder %s36, 0
      %p351 = por %p349, %p350
      %p352 = scmp.ne.s32.totalorder %s340, %s341
      %p353 = scmp.eq.s32.totalorder %s37, 3
      %p354 = por %p352, %p353
      %p356 = scmp.ne.s32.totalorder %s341, %s355
      %p357 = scmp.eq.s32.totalorder %s37, 0
      %p358 = por %p356, %p357
      %s360 = sadd.s32 %s359, 1
      %p363 = scmp.eq.s32.totalorder %s31, 3
      %p364 = scmp.ne.s32.totalorder %s359, %s361
      %p365 = scmp.eq.s32.totalorder %s31, 0
      %p366 = por %p364, %p365
      %p367 = scmp.ne.s32.totalorder %s359, %s361
      %p368 = scmp.eq.s32.totalorder %s36, 3
      %p369 = por %p367, %p368
      %p370 = scmp.ne.s32.totalorder %s361, %s362
      %p371 = scmp.eq.s32.totalorder %s36, 0
      %p372 = por %p370, %p371
      %p373 = scmp.ne.s32.totalorder %s361, %s362
      %p374 = scmp.eq.s32.totalorder %s37, 3
      %p375 = por %p373, %p374
      %p377 = scmp.ne.s32.totalorder %s362, %s376
      %p378 = scmp.eq.s32.totalorder %s37, 0
      %p379 = por %p377, %p378
      %s381 = sadd.s32 %s380, 1
      %p384 = scmp.eq.s32.totalorder %s31, 3
      %p385 = scmp.ne.s32.totalorder %s380, %s382
      %p386 = scmp.eq.s32.totalorder %s31, 0
      %p387 = por %p385, %p386
      %p388 = scmp.ne.s32.totalorder %s380, %s382
      %p389 = scmp.eq.s32.totalorder %s36, 3
      %p390 = por %p388, %p389
      %p391 = scmp.ne.s32.totalorder %s382, %s383
      %p392 = scmp.eq.s32.totalorder %s36, 0
      %p393 = por %p391, %p392
      %p394 = scmp.ne.s32.totalorder %s382, %s383
      %p395 = scmp.eq.s32.totalorder %s37, 3
      %p396 = por %p394, %p395
      %p398 = scmp.ne.s32.totalorder %s383, %s397
      %p399 = scmp.eq.s32.totalorder %s37, 0
      %p400 = por %p398, %p399
      %s402 = sadd.s32 %s401, 1
      %p405 = scmp.eq.s32.totalorder %s31, 3
      %p406 = scmp.ne.s32.totalorder %s401, %s403
      %p407 = scmp.eq.s32.totalorder %s31, 0
      %p408 = por %p406, %p407
      %p409 = scmp.ne.s32.totalorder %s401, %s403
      %p410 = scmp.eq.s32.totalorder %s36, 3
      %p411 = por %p409, %p410
      %p412 = scmp.ne.s32.totalorder %s403, %s404
      %p413 = scmp.eq.s32.totalorder %s36, 0
      %p414 = por %p412, %p413
      %p415 = scmp.ne.s32.totalorder %s403, %s404
      %p416 = scmp.eq.s32.totalorder %s37, 3
      %p417 = por %p415, %p416
      %p419 = scmp.ne.s32.totalorder %s404, %s418
      %p420 = scmp.eq.s32.totalorder %s37, 0
      %p421 = por %p419, %p420
      %s422 = ssub.s32 %s31, %s38
      %p423 = scmp.eq.s32.totalorder %s422, 0
      %s425 = sadd.s32 %s424, 1
      %s426 = scalar_select %p423, %s424, %s425
      %p429 = pneg %p423
      %p430 = scmp.eq.s32.totalorder %s31, 3
      %p431 = por %p429, %p430
      %p432 = scmp.ne.s32.totalorder %s424, %s427
      %p433 = scmp.eq.s32.totalorder %s31, 0
      %p434 = por %p432, %p433
      %p435 = scmp.ne.s32.totalorder %s424, %s427
      %p436 = scmp.eq.s32.totalorder %s36, 3
      %p437 = por %p435, %p436
      %p438 = scmp.ne.s32.totalorder %s427, %s428
      %p439 = scmp.eq.s32.totalorder %s36, 0
      %p440 = por %p438, %p439
      %p441 = scmp.ne.s32.totalorder %s427, %s428
      %p442 = scmp.eq.s32.totalorder %s37, 3
      %p443 = por %p441, %p442
      %p445 = scmp.ne.s32.totalorder %s428, %s444
      %p446 = scmp.eq.s32.totalorder %s37, 0
      %p447 = por %p445, %p446
      %p448 = scmp.le.s32.totalorder 1, %s31
      %p449 = scmp.lt.s32.totalorder %s31, 5
      %p450 = pnand %p448, %p449
      %p451 = pneg %p450
      // Predicated region
      $region9: #{tpu_custom_call.1} parent=5 // pred_check
        _
      $region10: #{tpu_custom_call.1} parent=5 // pred_check_branch
        %453 = sbr.rel (%p450) target = $region12
      $region11: #{tpu_custom_call.1} parent=5 // pred_region
        %s454 = ssub.s32 %s31, 1
        // Predicated region
        $region13: #{tpu_custom_call.1} parent=11 // pred_check
          %p455 = pneg %p78
        $region14: #{tpu_custom_call.1} parent=11 // pred_check_branch
          %457 = sbr.rel (%p455) target = $region16
        $region15: #{tpu_custom_call.1} parent=11 // pred_region
          _
        $region16: #{tpu_custom_call.1} parent=11 // pred_fallthru
          _
        // Predicated region
        $region17: #{tpu_custom_call.1} parent=11 // pred_check
          %p458 = pneg %p99
        $region18: #{tpu_custom_call.1} parent=11 // pred_check_branch
          %460 = sbr.rel (%p458) target = $region20
        $region19: #{tpu_custom_call.1} parent=11 // pred_region
          %462 = vsyncadd [#allocation5], 0
          %s463 = sshll.u32 %s2, 4
          %s464 = int_to_ptr.hbm [resolvable:$true] %s463
          %s465 = sshll.u32 [#allocation4], 4
          %s466 = int_to_ptr.vmem [resolvable:$true] %s465
          %471 = dma.hbm_to_vmem [thread:$0]  %s464, 5632, %s466, [#allocation5], 256, 256, 16
        $region20: #{tpu_custom_call.1} parent=11 // pred_fallthru
          _
        // Predicated region
        $region21: #{tpu_custom_call.1} parent=11 // pred_check
          %p472 = pneg %p120
        $region22: #{tpu_custom_call.1} parent=11 // pred_check_branch
          %474 = sbr.rel (%p472) target = $region24
        $region23: #{tpu_custom_call.1} parent=11 // pred_region
          %476 = vsyncadd [#allocation5], 0
          %s477 = sshll.u32 %s3, 4
          %s478 = int_to_ptr.hbm [resolvable:$true] %s477
          %s479 = sshll.u32 [#allocation6], 4
          %s480 = int_to_ptr.vmem [resolvable:$true] %s479
          %485 = dma.hbm_to_vmem [thread:$0]  %s478, 1408, %s480, [#allocation5], 128, 128, 8
        $region24: #{tpu_custom_call.1} parent=11 // pred_fallthru
          _
        // Predicated region
        $region25: #{tpu_custom_call.1} parent=11 // pred_check
          %p486 = pneg %p141
        $region26: #{tpu_custom_call.1} parent=11 // pred_check_branch
          %488 = sbr.rel (%p486) target = $region28
        $region27: #{tpu_custom_call.1} parent=11 // pred_region
          %490 = vsyncadd [#allocation8], 0
          %s491 = sshll.u32 %s4, 4
          %s492 = int_to_ptr.hbm [resolvable:$true] %s491
          %s493 = sshll.u32 [#allocation7], 4
          %s494 = int_to_ptr.vmem [resolvable:$true] %s493
          %499 = dma.hbm_to_vmem [thread:$0]  %s492, 4096, %s494, [#allocation8], 128, 128, 8
        $region28: #{tpu_custom_call.1} parent=11 // pred_fallthru
          _
        // Predicated region
        $region29: #{tpu_custom_call.1} parent=11 // pred_check
          %p500 = pneg %p162
        $region30: #{tpu_custom_call.1} parent=11 // pred_check_branch
          %502 = sbr.rel (%p500) target = $region32
        $region31: #{tpu_custom_call.1} parent=11 // pred_region
          %504 = vsyncadd [#allocation8], 0
          %s505 = sshll.u32 %s5, 4
          %s506 = int_to_ptr.hbm [resolvable:$true] %s505
          %s507 = sshll.u32 [#allocation9], 4
          %s508 = int_to_ptr.vmem [resolvable:$true] %s507
          %513 = dma.hbm_to_vmem [thread:$0]  %s506, 1024, %s508, [#allocation8], 64, 64, 4
        $region32: #{tpu_custom_call.1} parent=11 // pred_fallthru
          _
        // Predicated region
        $region33: #{tpu_custom_call.1} parent=11 // pred_check
          %p514 = pneg %p183
        $region34: #{tpu_custom_call.1} parent=11 // pred_check_branch
          %516 = sbr.rel (%p514) target = $region36
        $region35: #{tpu_custom_call.1} parent=11 // pred_region
          %518 = vsyncadd [#allocation11], 0
          %s519 = sshll.u32 %s6, 4
          %s520 = int_to_ptr.hbm [resolvable:$true] %s519
          %s521 = sshll.u32 [#allocation10], 4
          %s522 = int_to_ptr.vmem [resolvable:$true] %s521
          %527 = dma.hbm_to_vmem [thread:$0]  %s520, 4096, %s522, [#allocation11], 128, 128, 8
        $region36: #{tpu_custom_call.1} parent=11 // pred_fallthru
          _
        // Predicated region
        $region37: #{tpu_custom_call.1} parent=11 // pred_check
          %p528 = pneg %p204
        $region38: #{tpu_custom_call.1} parent=11 // pred_check_branch
          %530 = sbr.rel (%p528) target = $region40
        $region39: #{tpu_custom_call.1} parent=11 // pred_region
          %532 = vsyncadd [#allocation11], 0
          %s533 = sshll.u32 %s7, 4
          %s534 = int_to_ptr.hbm [resolvable:$true] %s533
          %s535 = sshll.u32 [#allocation12], 4
          %s536 = int_to_ptr.vmem [resolvable:$true] %s535
          %541 = dma.hbm_to_vmem [thread:$0]  %s534, 1024, %s536, [#allocation11], 64, 64, 4
        $region40: #{tpu_custom_call.1} parent=11 // pred_fallthru
          _
        // Predicated region
        $region41: #{tpu_custom_call.1} parent=11 // pred_check
          %p542 = pneg %p225
        $region42: #{tpu_custom_call.1} parent=11 // pred_check_branch
          %544 = sbr.rel (%p542) target = $region44
        $region43: #{tpu_custom_call.1} parent=11 // pred_region
          %546 = vsyncadd [#allocation14], 0
          %s547 = sshll.u32 %s8, 4
          %s548 = int_to_ptr.hbm [resolvable:$true] %s547
          %s549 = sshll.u32 [#allocation13], 4
          %s550 = int_to_ptr.vmem [resolvable:$true] %s549
          %555 = dma.hbm_to_vmem [thread:$0]  %s548, 4096, %s550, [#allocation14], 128, 128, 8
        $region44: #{tpu_custom_call.1} parent=11 // pred_fallthru
          _
        // Predicated region
        $region45: #{tpu_custom_call.1} parent=11 // pred_check
          %p556 = pneg %p246
        $region46: #{tpu_custom_call.1} parent=11 // pred_check_branch
          %558 = sbr.rel (%p556) target = $region48
        $region47: #{tpu_custom_call.1} parent=11 // pred_region
          %560 = vsyncadd [#allocation14], 0
          %s561 = sshll.u32 %s9, 4
          %s562 = int_to_ptr.hbm [resolvable:$true] %s561
          %s563 = sshll.u32 [#allocation15], 4
          %s564 = int_to_ptr.vmem [resolvable:$true] %s563
          %569 = dma.hbm_to_vmem [thread:$0]  %s562, 1024, %s564, [#allocation14], 64, 64, 4
        $region48: #{tpu_custom_call.1} parent=11 // pred_fallthru
          _
        // Predicated region
        $region49: #{tpu_custom_call.1} parent=11 // pred_check
          %p570 = pneg %p267
        $region50: #{tpu_custom_call.1} parent=11 // pred_check_branch
          %572 = sbr.rel (%p570) target = $region52
        $region51: #{tpu_custom_call.1} parent=11 // pred_region
          _
        $region52: #{tpu_custom_call.1} parent=11 // pred_fallthru
          _
        // Predicated region
        $region53: #{tpu_custom_call.1} parent=11 // pred_check
          %p573 = pneg %p288
        $region54: #{tpu_custom_call.1} parent=11 // pred_check_branch
          %575 = sbr.rel (%p573) target = $region56
        $region55: #{tpu_custom_call.1} parent=11 // pred_region
          _
        $region56: #{tpu_custom_call.1} parent=11 // pred_fallthru
          _
        // Predicated region
        $region57: #{tpu_custom_call.1} parent=11 // pred_check
          %p576 = pneg %p309
        $region58: #{tpu_custom_call.1} parent=11 // pred_check_branch
          %578 = sbr.rel (%p576) target = $region60
        $region59: #{tpu_custom_call.1} parent=11 // pred_region
          _
        $region60: #{tpu_custom_call.1} parent=11 // pred_fallthru
          _
        // Predicated region
        $region61: #{tpu_custom_call.1} parent=11 // pred_check
          %p579 = pneg %p330
        $region62: #{tpu_custom_call.1} parent=11 // pred_check_branch
          %581 = sbr.rel (%p579) target = $region64
        $region63: #{tpu_custom_call.1} parent=11 // pred_region
          _
        $region64: #{tpu_custom_call.1} parent=11 // pred_fallthru
          _
        // Predicated region
        $region65: #{tpu_custom_call.1} parent=11 // pred_check
          %p582 = pneg %p351
        $region66: #{tpu_custom_call.1} parent=11 // pred_check_branch
          %584 = sbr.rel (%p582) target = $region68
        $region67: #{tpu_custom_call.1} parent=11 // pred_region
          _
        $region68: #{tpu_custom_call.1} parent=11 // pred_fallthru
          _
        // Predicated region
        $region69: #{tpu_custom_call.1} parent=11 // pred_check
          %p585 = pneg %p372
        $region70: #{tpu_custom_call.1} parent=11 // pred_check_branch
          %587 = sbr.rel (%p585) target = $region72
        $region71: #{tpu_custom_call.1} parent=11 // pred_region
          _
        $region72: #{tpu_custom_call.1} parent=11 // pred_fallthru
          _
        // Predicated region
        $region73: #{tpu_custom_call.1} parent=11 // pred_check
          %p588 = pneg %p393
        $region74: #{tpu_custom_call.1} parent=11 // pred_check_branch
          %590 = sbr.rel (%p588) target = $region76
        $region75: #{tpu_custom_call.1} parent=11 // pred_region
          _
        $region76: #{tpu_custom_call.1} parent=11 // pred_fallthru
          _
        // Predicated region
        $region77: #{tpu_custom_call.1} parent=11 // pred_check
          %p591 = pneg %p414
        $region78: #{tpu_custom_call.1} parent=11 // pred_check_branch
          %593 = sbr.rel (%p591) target = $region80
        $region79: #{tpu_custom_call.1} parent=11 // pred_region
          _
        $region80: #{tpu_custom_call.1} parent=11 // pred_fallthru
          _
      $region12: #{tpu_custom_call.1} parent=5 // pred_fallthru
        _
      %p594 = scmp.lt.s32.totalorder %s31, 4
      // Predicated region
      $region81: #{tpu_custom_call.1} parent=5 // pred_check
        %p595 = pneg %p594
      $region82: #{tpu_custom_call.1} parent=5 // pred_check_branch
        %597 = sbr.rel (%p595) target = $region84
      $region83: #{tpu_custom_call.1} parent=5 // pred_region
        // Predicated region
        $region85: #{tpu_custom_call.1} parent=83 // pred_check
          %p598 = pneg %p51
        $region86: #{tpu_custom_call.1} parent=83 // pred_check_branch
          %600 = sbr.rel (%p598) target = $region88
        $region87: #{tpu_custom_call.1} parent=83 // pred_region
          %s601 = sand.u32 %s41, 1
          %s602 = scalar_lea.sflag [#allocation3], %s601
          %s603 = sand.u32 %s41, 1
          %s604 = smul.addr %s603, 48
          %s605 = scalar_lea.vmem [#allocation2], %s604
          %s606 = smul.u32 2, %s31
          %608 = vsyncadd %s602, 0
          %s609 = smul.addr %s606, 3
          %s610 = smul.addr %s609, 8
          %s611 = scalar_lea.hbm %s0, %s610
          %s612 = sshll.u32 %s611, 4
          %s613 = int_to_ptr.hbm [resolvable:$true] %s612
          %s614 = sshll.u32 %s605, 4
          %s615 = int_to_ptr.vmem [resolvable:$true] %s614
          %620 = dma.hbm_to_vmem [thread:$0]  %s613, 768, %s615, %s602, 384, 384, 24
        $region88: #{tpu_custom_call.1} parent=83 // pred_fallthru
          _
      $region84: #{tpu_custom_call.1} parent=5 // pred_fallthru
        _
      %p621 = scmp.le.s32.totalorder 1, %s31
      %p622 = scmp.lt.s32.totalorder %s31, 5
      %p623 = pnand %p621, %p622
      %p624 = pneg %p623
      // Predicated region
      $region89: #{tpu_custom_call.1} parent=5 // pred_check
        _
      $region90: #{tpu_custom_call.1} parent=5 // pred_check_branch
        %626 = sbr.rel (%p623) target = $region92
      $region91: #{tpu_custom_call.1} parent=5 // pred_region
        %s627 = ssub.s32 %s31, 1
        %s628 = sand.u32 %s44, 1
        %s629 = scalar_lea.sflag [#allocation3], %s628
        %s630 = sand.u32 %s44, 1
        %s631 = smul.addr %s630, 48
        %s632 = scalar_lea.vmem [#allocation2], %s631
        // Predicated region
        $region93: #{tpu_custom_call.1} parent=91 // pred_check
          %p633 = pneg %p57
        $region94: #{tpu_custom_call.1} parent=91 // pred_check_branch
          %635 = sbr.rel (%p633) target = $region96
        $region95: #{tpu_custom_call.1} parent=91 // pred_region
          %637 = dma.done %s629, 768
        $region96: #{tpu_custom_call.1} parent=91 // pred_fallthru
          _
        // Predicated region
        $region97: #{tpu_custom_call.1} parent=91 // pred_check
          %p638 = pneg %p99
        $region98: #{tpu_custom_call.1} parent=91 // pred_check_branch
          %640 = sbr.rel (%p638) target = $region100
        $region99: #{tpu_custom_call.1} parent=91 // pred_region
          %642 = dma.done [#allocation5], 5632
        $region100: #{tpu_custom_call.1} parent=91 // pred_fallthru
          _
        // Predicated region
        $region101: #{tpu_custom_call.1} parent=91 // pred_check
          %p643 = pneg %p120
        $region102: #{tpu_custom_call.1} parent=91 // pred_check_branch
          %645 = sbr.rel (%p643) target = $region104
        $region103: #{tpu_custom_call.1} parent=91 // pred_region
          %647 = dma.done [#allocation5], 1408
        $region104: #{tpu_custom_call.1} parent=91 // pred_fallthru
          _
        // Predicated region
        $region105: #{tpu_custom_call.1} parent=91 // pred_check
          %p648 = pneg %p141
        $region106: #{tpu_custom_call.1} parent=91 // pred_check_branch
          %650 = sbr.rel (%p648) target = $region108
        $region107: #{tpu_custom_call.1} parent=91 // pred_region
          %652 = dma.done [#allocation8], 4096
        $region108: #{tpu_custom_call.1} parent=91 // pred_fallthru
          _
        // Predicated region
        $region109: #{tpu_custom_call.1} parent=91 // pred_check
          %p653 = pneg %p162
        $region110: #{tpu_custom_call.1} parent=91 // pred_check_branch
          %655 = sbr.rel (%p653) target = $region112
        $region111: #{tpu_custom_call.1} parent=91 // pred_region
          %657 = dma.done [#allocation8], 1024
        $region112: #{tpu_custom_call.1} parent=91 // pred_fallthru
          _
        // Predicated region
        $region113: #{tpu_custom_call.1} parent=91 // pred_check
          %p658 = pneg %p183
        $region114: #{tpu_custom_call.1} parent=91 // pred_check_branch
          %660 = sbr.rel (%p658) target = $region116
        $region115: #{tpu_custom_call.1} parent=91 // pred_region
          %662 = dma.done [#allocation11], 4096
        $region116: #{tpu_custom_call.1} parent=91 // pred_fallthru
          _
        // Predicated region
        $region117: #{tpu_custom_call.1} parent=91 // pred_check
          %p663 = pneg %p204
        $region118: #{tpu_custom_call.1} parent=91 // pred_check_branch
          %665 = sbr.rel (%p663) target = $region120
        $region119: #{tpu_custom_call.1} parent=91 // pred_region
          %667 = dma.done [#allocation11], 1024
        $region120: #{tpu_custom_call.1} parent=91 // pred_fallthru
          _
        // Predicated region
        $region121: #{tpu_custom_call.1} parent=91 // pred_check
          %p668 = pneg %p225
        $region122: #{tpu_custom_call.1} parent=91 // pred_check_branch
          %670 = sbr.rel (%p668) target = $region124
        $region123: #{tpu_custom_call.1} parent=91 // pred_region
          %672 = dma.done [#allocation14], 4096
        $region124: #{tpu_custom_call.1} parent=91 // pred_fallthru
          _
        // Predicated region
        $region125: #{tpu_custom_call.1} parent=91 // pred_check
          %p673 = pneg %p246
        $region126: #{tpu_custom_call.1} parent=91 // pred_check_branch
          %675 = sbr.rel (%p673) target = $region128
        $region127: #{tpu_custom_call.1} parent=91 // pred_region
          %677 = dma.done [#allocation14], 1024
        $region128: #{tpu_custom_call.1} parent=91 // pred_fallthru
          _
        %s678 = sand.u32 %s44, 1
        %s679 = scalar_lea.sflag [#allocation3], %s678
        %s680 = sand.u32 %s44, 1
        %s681 = smul.addr %s680, 48
        %s682 = scalar_lea.vmem [#allocation2], %s681
        %p683 = pneg %p57
        %p684 = pneg %p54
        %p685 = pneg %p78
        %p686 = pneg %p75
        %p687 = pneg %p99
        %p688 = pneg %p96
        %p689 = pneg %p120
        %p690 = pneg %p117
        %p691 = pneg %p141
        %p692 = pneg %p138
        %p693 = pneg %p162
        %p694 = pneg %p159
        %p695 = pneg %p183
        %p696 = pneg %p180
        %p697 = pneg %p204
        %p698 = pneg %p201
        %p699 = pneg %p225
        %p700 = pneg %p222
        %p701 = pneg %p246
        %p702 = pneg %p243
        %p703 = pneg %p267
        %p704 = pneg %p264
        %p705 = pneg %p288
        %p706 = pneg %p285
        %p707 = pneg %p309
        %p708 = pneg %p306
        %p709 = pneg %p330
        %p710 = pneg %p327
        %p711 = pneg %p351
        %p712 = pneg %p348
        %p713 = pneg %p372
        %p714 = pneg %p369
        %p715 = pneg %p393
        %p716 = pneg %p390
        %p717 = pneg %p414
        %p718 = pneg %p411
        %p719 = pneg %p440
        %p720 = pneg %p437
        %s721 = smul.u32 2, %s36
        %p722 = scmp.lt.s32.totalorder %s721, 7
        %s723 = scalar_select %p722, %s721, 7
        %s724 = smul.addr %s723, 8
        %s725 = scalar_lea.vmem %s18, %s724
        %s726 = smul.u32 2, %s36
        %s727 = smul.u32 2, %s36
        %p728 = scmp.lt.s32.totalorder %s727, 7
        %s729 = scalar_select %p728, %s727, 7
        %s730 = smul.addr %s729, 8
        %s731 = scalar_lea.vmem %s18, %s730
        %s732 = smul.u32 2, %s36
        %v734 = vld [vmem:[%s632] sm:$0xff]
        %v735 = vld [vmem:[%s632 + $0x8] sm:$0xff]
        %v736 = vld [vmem:[%s632 + $0x10] sm:$0xff]
        %v737 = vld [vmem:[%s632 + $0x18] sm:$0xff]
        %v738 = vld [vmem:[%s632 + $0x20] sm:$0xff]
        %v739 = vld [vmem:[%s632 + $0x28] sm:$0xff]
        %v740 = vld [vmem:[%s1] sm:$0x7]
        %vm741 = vcmp.ne.f32.partialorder %v740, 0.0
        %v742 = vtanh.pop %v734
        %v743 = vtanh.pop %v735
        %v744 = vtanh.pop %v736
        %v745 = vtanh.pop %v737
        %v746 = vtanh.pop %v738
        %v747 = vtanh.pop %v739
        %v748 = vsel %vm741, 1, 0
        %v749 = vperm.slane %v748, 0
        %v750 = vperm.slane %v748, 1
        %v751 = vperm.slane %v748, 2
        %vm752 = vcmp.eq.s32.totalorder %v749, 1
        %vm753 = vcmp.eq.s32.totalorder %v750, 1
        %vm754 = vcmp.eq.s32.totalorder %v751, 1
        %v755 = vsel %vm752, %v742, %v734
        %v756 = vsel %vm753, %v743, %v735
        %v757 = vsel %vm754, %v744, %v736
        %v758 = vsel %vm752, %v745, %v737
        %v759 = vsel %vm753, %v746, %v738
        %v760 = vsel %vm754, %v747, %v739
        %v761 = vpack.c.bf16 %v756, %v755
        %v762 = vpack.c.bf16 %v757, %v757
        %v763 = vpack.c.bf16 %v759, %v758
        %v764 = vpack.c.bf16 %v760, %v760
        %v765 = vld [vmem:[%s10] sm:$0x3]
        %v766 = vld [vmem:[%s11] sm:$0x3]
        %v767 = vld [vmem:[%s12] sm:$0x3]
        %v768 = vld [vmem:[%s13] sm:$0x3]
        %v769 = vld [vmem:[%s14] sm:$0x3]
        %v770 = vld [vmem:[#allocation4] sm:$0xff]
        %v771 = vld [vmem:[#allocation4 + $0x8] sm:$0xff]
        %v772 = vld [vmem:[#allocation4 + $0x10] sm:$0xff]
        %v773 = vld [vmem:[#allocation4 + $0x18] sm:$0xff]
        %v774 = vld [vmem:[#allocation4 + $0x20] sm:$0xff]
        %v775 = vld [vmem:[#allocation4 + $0x28] sm:$0xff]
        %v776 = vld [vmem:[#allocation4 + $0x30] sm:$0xff]
        %v777 = vld [vmem:[#allocation4 + $0x38] sm:$0xff]
        %v778 = vld [vmem:[#allocation4 + $0x40] sm:$0xff]
        %v779 = vld [vmem:[#allocation4 + $0x48] sm:$0xff]
        %v780 = vld [vmem:[#allocation4 + $0x50] sm:$0xff]
        %v781 = vld [vmem:[#allocation4 + $0x58] sm:$0xff]
        %v782 = vld [vmem:[#allocation4 + $0x60] sm:$0xff]
        %v783 = vld [vmem:[#allocation4 + $0x68] sm:$0xff]
        %v784 = vld [vmem:[#allocation4 + $0x70] sm:$0xff]
        %v785 = vld [vmem:[#allocation4 + $0x78] sm:$0xff]
        %v786 = vld [vmem:[#allocation4 + $0x80] sm:$0xff]
        %v787 = vld [vmem:[#allocation4 + $0x88] sm:$0xff]
        %v788 = vld [vmem:[#allocation4 + $0x90] sm:$0xff]
        %v789 = vld [vmem:[#allocation4 + $0x98] sm:$0xff]
        %v790 = vld [vmem:[#allocation4 + $0xa0] sm:$0xff]
        %v791 = vld [vmem:[#allocation4 + $0xa8] sm:$0xff]
        %v792 = vld [vmem:[#allocation4 + $0xb0] sm:$0xff]
        %v793 = vld [vmem:[#allocation4 + $0xb8] sm:$0xff]
        %v794 = vld [vmem:[#allocation4 + $0xc0] sm:$0xff]
        %v795 = vld [vmem:[#allocation4 + $0xc8] sm:$0xff]
        %v796 = vld [vmem:[#allocation4 + $0xd0] sm:$0xff]
        %v797 = vld [vmem:[#allocation4 + $0xd8] sm:$0xff]
        %v798 = vld [vmem:[#allocation4 + $0xe0] sm:$0xff]
        %v799 = vld [vmem:[#allocation4 + $0xe8] sm:$0xff]
        %v800 = vld [vmem:[#allocation4 + $0xf0] sm:$0xff]
        %v801 = vld [vmem:[#allocation4 + $0xf8] sm:$0xff]
        %v802 = vld [vmem:[#allocation4 + $0x100] sm:$0xff]
        %v803 = vld [vmem:[#allocation4 + $0x108] sm:$0xff]
        %v804 = vld [vmem:[#allocation4 + $0x110] sm:$0xff]
        %v805 = vld [vmem:[#allocation4 + $0x118] sm:$0xff]
        %v806 = vld [vmem:[#allocation4 + $0x120] sm:$0xff]
        %v807 = vld [vmem:[#allocation4 + $0x128] sm:$0xff]
        %v808 = vld [vmem:[#allocation4 + $0x130] sm:$0xff]
        %v809 = vld [vmem:[#allocation4 + $0x138] sm:$0xff]
        %v810 = vld [vmem:[#allocation4 + $0x140] sm:$0xff]
        %v811 = vld [vmem:[#allocation4 + $0x148] sm:$0xff]
        %v812 = vld [vmem:[#allocation4 + $0x150] sm:$0x33]
        %v813 = vld [vmem:[#allocation4 + $0x158] sm:$0x33]
        %v816 = vunpack.c.l.b16 %v761
        %v817 = vunpack.c.h.b16 %v761
        %v818 = vunpack.c.l.b16 %v763
        %v819 = vunpack.c.h.b16 %v763
        %v820 = vpack.c.b16 %v818, %v816
        %v821 = vpack.c.b16 %v819, %v817
        %v867 = vunpack.c.l.b16 %v770
        %v868 = vunpack.c.h.b16 %v770
        %v869 = vunpack.c.l.b16 %v771
        %v870 = vunpack.c.h.b16 %v771
        %v871 = vunpack.c.l.b16 %v772
        %v872 = vunpack.c.h.b16 %v772
        %v873 = vunpack.c.l.b16 %v773
        %v874 = vunpack.c.h.b16 %v773
        %v875 = vunpack.c.l.b16 %v774
        %v876 = vunpack.c.h.b16 %v774
        %v877 = vunpack.c.l.b16 %v775
        %v878 = vunpack.c.h.b16 %v775
        %v879 = vunpack.c.l.b16 %v776
        %v880 = vunpack.c.h.b16 %v776
        %v881 = vunpack.c.l.b16 %v777
        %v882 = vunpack.c.h.b16 %v777
        %v883 = vunpack.c.l.b16 %v778
        %v884 = vunpack.c.h.b16 %v778
        %v885 = vunpack.c.l.b16 %v779
        %v886 = vunpack.c.h.b16 %v779
        %v887 = vunpack.c.l.b16 %v780
        %v888 = vunpack.c.h.b16 %v780
        %v889 = vunpack.c.l.b16 %v781
        %v890 = vunpack.c.h.b16 %v781
        %v891 = vunpack.c.l.b16 %v782
        %v892 = vunpack.c.h.b16 %v782
        %v893 = vunpack.c.l.b16 %v783
        %v894 = vunpack.c.h.b16 %v783
        %v895 = vunpack.c.l.b16 %v784
        %v896 = vunpack.c.h.b16 %v784
        %v897 = vunpack.c.l.b16 %v785
        %v898 = vunpack.c.h.b16 %v785
        %v899 = vunpack.c.l.b16 %v786
        %v900 = vunpack.c.h.b16 %v786
        %v901 = vunpack.c.l.b16 %v787
        %v902 = vunpack.c.h.b16 %v787
        %v903 = vunpack.c.l.b16 %v788
        %v904 = vunpack.c.h.b16 %v788
        %v905 = vunpack.c.l.b16 %v789
        %v906 = vunpack.c.h.b16 %v789
        %v907 = vunpack.c.l.b16 %v790
        %v908 = vunpack.c.h.b16 %v790
        %v909 = vunpack.c.l.b16 %v791
        %v910 = vunpack.c.h.b16 %v791
        %v911 = vunpack.c.l.b16 %v792
        %v912 = vunpack.c.h.b16 %v792
        %v913 = vunpack.c.l.b16 %v793
        %v914 = vunpack.c.h.b16 %v793
        %v915 = vunpack.c.l.b16 %v794
        %v916 = vunpack.c.h.b16 %v794
        %v917 = vunpack.c.l.b16 %v795
        %v918 = vunpack.c.h.b16 %v795
        %v919 = vunpack.c.l.b16 %v796
        %v920 = vunpack.c.h.b16 %v796
        %v921 = vunpack.c.l.b16 %v797
        %v922 = vunpack.c.h.b16 %v797
        %v923 = vunpack.c.l.b16 %v798
        %v924 = vunpack.c.h.b16 %v798
        %v925 = vunpack.c.l.b16 %v799
        %v926 = vunpack.c.h.b16 %v799
        %v927 = vunpack.c.l.b16 %v800
        %v928 = vunpack.c.h.b16 %v800
        %v929 = vunpack.c.l.b16 %v801
        %v930 = vunpack.c.h.b16 %v801
        %v931 = vunpack.c.l.b16 %v802
        %v932 = vunpack.c.h.b16 %v802
        %v933 = vunpack.c.l.b16 %v803
        %v934 = vunpack.c.h.b16 %v803
        %v935 = vunpack.c.l.b16 %v804
        %v936 = vunpack.c.h.b16 %v804
        %v937 = vunpack.c.l.b16 %v805
        %v938 = vunpack.c.h.b16 %v805
        %v939 = vunpack.c.l.b16 %v806
        %v940 = vunpack.c.h.b16 %v806
        %v941 = vunpack.c.l.b16 %v807
        %v942 = vunpack.c.h.b16 %v807
        %v943 = vunpack.c.l.b16 %v808
        %v944 = vunpack.c.h.b16 %v808
        %v945 = vunpack.c.l.b16 %v809
        %v946 = vunpack.c.h.b16 %v809
        %v947 = vunpack.c.l.b16 %v810
        %v948 = vunpack.c.h.b16 %v810
        %v949 = vunpack.c.l.b16 %v811
        %v950 = vunpack.c.h.b16 %v811
        %v951 = vunpack.c.l.b16 %v812
        %v952 = vunpack.c.h.b16 %v812
        %v953 = vunpack.c.l.b16 %v813
        %v954 = vunpack.c.h.b16 %v813
        %v955 = vpack.c.b16 %v871, %v867
        %v956 = vpack.c.b16 %v872, %v868
        %v957 = vpack.c.b16 %v873, %v869
        %v958 = vpack.c.b16 %v874, %v870
        %v959 = vpack.c.b16 %v879, %v875
        %v960 = vpack.c.b16 %v880, %v876
        %v961 = vpack.c.b16 %v881, %v877
        %v962 = vpack.c.b16 %v882, %v878
        %v963 = vpack.c.b16 %v887, %v883
        %v964 = vpack.c.b16 %v888, %v884
        %v965 = vpack.c.b16 %v889, %v885
        %v966 = vpack.c.b16 %v890, %v886
        %v967 = vpack.c.b16 %v895, %v891
        %v968 = vpack.c.b16 %v896, %v892
        %v969 = vpack.c.b16 %v897, %v893
        %v970 = vpack.c.b16 %v898, %v894
        %v971 = vpack.c.b16 %v903, %v899
        %v972 = vpack.c.b16 %v904, %v900
        %v973 = vpack.c.b16 %v905, %v901
        %v974 = vpack.c.b16 %v906, %v902
        %v975 = vpack.c.b16 %v911, %v907
        %v976 = vpack.c.b16 %v912, %v908
        %v977 = vpack.c.b16 %v913, %v909
        %v978 = vpack.c.b16 %v914, %v910
        %v979 = vpack.c.b16 %v919, %v915
        %v980 = vpack.c.b16 %v920, %v916
        %v981 = vpack.c.b16 %v921, %v917
        %v982 = vpack.c.b16 %v922, %v918
        %v983 = vpack.c.b16 %v927, %v923
        %v984 = vpack.c.b16 %v928, %v924
        %v985 = vpack.c.b16 %v929, %v925
        %v986 = vpack.c.b16 %v930, %v926
        %v987 = vpack.c.b16 %v935, %v931
        %v988 = vpack.c.b16 %v936, %v932
        %v989 = vpack.c.b16 %v937, %v933
        %v990 = vpack.c.b16 %v938, %v934
        %v991 = vpack.c.b16 %v943, %v939
        %v992 = vpack.c.b16 %v944, %v940
        %v993 = vpack.c.b16 %v945, %v941
        %v994 = vpack.c.b16 %v946, %v942
        %v995 = vpack.c.b16 %v951, %v947
        %v996 = vpack.c.b16 %v952, %v948
        %v997 = vpack.c.b16 %v953, %v949
        %v998 = vpack.c.b16 %v954, %v950
        %vm1039 = vcmask 359424
        %v1041 = vsel %vm1039, %v821, 0
        %vm1043 = vcmask 1045504
        %v1045 = vsel %vm1043, %v995, 0
        %v1048 = vsel %vm1043, %v996, 0
        %v1051 = vsel %vm1043, %v997, 0
        %v1054 = vsel %vm1043, %v998, 0
        %1056 = vmatpush.bf16.msra.mxu0 %v983
        %1057 = vmatpush.bf16.msra.mxu0 %v979
        %1058 = vmatpush.bf16.msra.mxu0 %v975
        %1059 = vmatpush.bf16.msra.mxu0 %v971
        %1060 = vmatpush.bf16.msra.mxu0 %v967
        %1061 = vmatpush.bf16.msra.mxu0 %v963
        %1062 = vmatpush.bf16.msra.mxu0 %v959
        %1063 = vmatpush.bf16.msra.mxu0 %v955
        %1064 = vmatmul.bf16.gmra.mxu0 %v820
        %v1065 = vpop.f32.mrf.mxu0
        %v1066 = vadd.f32 0.0, %v1065
        %v1067 = vpop.f32.mrf.mxu0
        %v1068 = vadd.f32 0.0, %v1067
        %1069 = vdwg.mxu0
        %1070 = vmatpush.bf16.msra.mxu0 0
        %1071 = vmatpush.bf16.msra.mxu0 0
        %1072 = vmatpush.bf16.msra.mxu0 0
        %1073 = vmatpush.bf16.msra.mxu0 0
        %1074 = vmatpush.bf16.msra.mxu0 0
        %1075 = vmatpush.bf16.msra.mxu0 %v1045
        %1076 = vmatpush.bf16.msra.mxu0 %v991
        %1077 = vmatpush.bf16.msra.mxu0 %v987
        %1078 = vmatmul.bf16.gmra.mxu0 %v1041
        %v1079 = vpop.f32.mrf.mxu0
        %v1080 = vadd.f32 %v1066, %v1079
        %v1081 = vpop.f32.mrf.mxu0
        %v1082 = vadd.f32 %v1068, %v1081
        %1083 = vdwg.mxu0
        %1084 = vmatpush.bf16.msra.mxu0 %v984
        %1085 = vmatpush.bf16.msra.mxu0 %v980
        %1086 = vmatpush.bf16.msra.mxu0 %v976
        %1087 = vmatpush.bf16.msra.mxu0 %v972
        %1088 = vmatpush.bf16.msra.mxu0 %v968
        %1089 = vmatpush.bf16.msra.mxu0 %v964
        %1090 = vmatpush.bf16.msra.mxu0 %v960
        %1091 = vmatpush.bf16.msra.mxu0 %v956
        %1092 = vmatmul.bf16.gmra.mxu0 %v820
        %v1093 = vpop.f32.mrf.mxu0
        %v1094 = vadd.f32 0.0, %v1093
        %v1095 = vpop.f32.mrf.mxu0
        %v1096 = vadd.f32 0.0, %v1095
        %1097 = vdwg.mxu0
        %1098 = vmatpush.bf16.msra.mxu0 0
        %1099 = vmatpush.bf16.msra.mxu0 0
        %1100 = vmatpush.bf16.msra.mxu0 0
        %1101 = vmatpush.bf16.msra.mxu0 0
        %1102 = vmatpush.bf16.msra.mxu0 0
        %1103 = vmatpush.bf16.msra.mxu0 %v1048
        %1104 = vmatpush.bf16.msra.mxu0 %v992
        %1105 = vmatpush.bf16.msra.mxu0 %v988
        %1106 = vmatmul.bf16.gmra.mxu0 %v1041
        %v1107 = vpop.f32.mrf.mxu0
        %v1108 = vadd.f32 %v1094, %v1107
        %v1109 = vpop.f32.mrf.mxu0
        %v1110 = vadd.f32 %v1096, %v1109
        %1111 = vdwg.mxu0
        %1112 = vmatpush.bf16.msra.mxu0 %v985
        %1113 = vmatpush.bf16.msra.mxu0 %v981
        %1114 = vmatpush.bf16.msra.mxu0 %v977
        %1115 = vmatpush.bf16.msra.mxu0 %v973
        %1116 = vmatpush.bf16.msra.mxu0 %v969
        %1117 = vmatpush.bf16.msra.mxu0 %v965
        %1118 = vmatpush.bf16.msra.mxu0 %v961
        %1119 = vmatpush.bf16.msra.mxu0 %v957
        %1120 = vmatmul.bf16.gmra.mxu0 %v820
        %v1121 = vpop.f32.mrf.mxu0
        %v1122 = vadd.f32 0.0, %v1121
        %v1123 = vpop.f32.mrf.mxu0
        %v1124 = vadd.f32 0.0, %v1123
        %1125 = vdwg.mxu0
        %1126 = vmatpush.bf16.msra.mxu0 0
        %1127 = vmatpush.bf16.msra.mxu0 0
        %1128 = vmatpush.bf16.msra.mxu0 0
        %1129 = vmatpush.bf16.msra.mxu0 0
        %1130 = vmatpush.bf16.msra.mxu0 0
        %1131 = vmatpush.bf16.msra.mxu0 %v1051
        %1132 = vmatpush.bf16.msra.mxu0 %v993
        %1133 = vmatpush.bf16.msra.mxu0 %v989
        %1134 = vmatmul.bf16.gmra.mxu0 %v1041
        %v1135 = vpop.f32.mrf.mxu0
        %v1136 = vadd.f32 %v1122, %v1135
        %v1137 = vpop.f32.mrf.mxu0
        %v1138 = vadd.f32 %v1124, %v1137
        %1139 = vdwg.mxu0
        %1140 = vmatpush.bf16.msra.mxu0 %v986
        %1141 = vmatpush.bf16.msra.mxu0 %v982
        %1142 = vmatpush.bf16.msra.mxu0 %v978
        %1143 = vmatpush.bf16.msra.mxu0 %v974
        %1144 = vmatpush.bf16.msra.mxu0 %v970
        %1145 = vmatpush.bf16.msra.mxu0 %v966
        %1146 = vmatpush.bf16.msra.mxu0 %v962
        %1147 = vmatpush.bf16.msra.mxu0 %v958
        %1148 = vmatmul.bf16.gmra.mxu0 %v820
        %v1149 = vpop.f32.mrf.mxu0
        %v1150 = vadd.f32 0.0, %v1149
        %v1151 = vpop.f32.mrf.mxu0
        %v1152 = vadd.f32 0.0, %v1151
        %1153 = vdwg.mxu0
        %1154 = vmatpush.bf16.msra.mxu0 0
        %1155 = vmatpush.bf16.msra.mxu0 0
        %1156 = vmatpush.bf16.msra.mxu0 0
        %1157 = vmatpush.bf16.msra.mxu0 0
        %1158 = vmatpush.bf16.msra.mxu0 0
        %1159 = vmatpush.bf16.msra.mxu0 %v1054
        %1160 = vmatpush.bf16.msra.mxu0 %v994
        %1161 = vmatpush.bf16.msra.mxu0 %v990
        %1162 = vmatmul.bf16.gmra.mxu0 %v1041
        %v1163 = vpop.f32.mrf.mxu0
        %v1164 = vadd.f32 %v1150, %v1163
        %v1165 = vpop.f32.mrf.mxu0
        %v1166 = vadd.f32 %v1152, %v1165
        %1167 = vdwg.mxu0
        %v1169 = vperm.slane %v765, 0
        %v1170 = vperm.slane %v765, 1
        %v1173 = vadd.f32 %v1080, %v1169
        %v1174 = vadd.f32 %v1108, %v1170
        %v1175 = vadd.f32 %v1082, %v1169
        %v1176 = vadd.f32 %v1110, %v1170
        %v1177 = vmul.f32 %v1173, 0.01
        %v1178 = vmul.f32 %v1174, 0.01
        %v1179 = vmul.f32 %v1175, 0.01
        %v1180 = vmul.f32 %v1176, 0.01
        %v1181 = vmax.f32 %v1173, %v1177
        %v1182 = vmax.f32 %v1174, %v1178
        %v1183 = vmax.f32 %v1175, %v1179
        %v1184 = vmax.f32 %v1176, %v1180
        %v1186 = vperm.slane %v766, 0
        %v1187 = vperm.slane %v766, 1
        %v1190 = vadd.f32 %v1136, %v1186
        %v1191 = vadd.f32 %v1164, %v1187
        %v1192 = vadd.f32 %v1138, %v1186
        %v1193 = vadd.f32 %v1166, %v1187
        %v1194 = vtanh.pop %v1190
        %v1195 = vtanh.pop %v1191
        %v1196 = vtanh.pop %v1192
        %v1197 = vtanh.pop %v1193
        %1200 = vrot.lane.b32.xlu0 %v1181, 64
        %v1201 = vpop.permute.xlu0 %1200
        %1202 = vrot.lane.b32.xlu0 %v1183, 64
        %v1203 = vpop.permute.xlu0 %1202
        %vm1206 = vcmask 523264
        %v1207 = vsel %vm1206, %v1181, %v1201
        %v1208 = vsel %vm1206, %v1183, %v1203
        %v1209 = vsub.f32 %v1181, %v1207
        %v1210 = vsub.f32 %v1182, %v1207
        %v1211 = vsub.f32 %v1183, %v1208
        %v1212 = vsub.f32 %v1184, %v1208
        %v1213 = vpack.c.bf16 %v1211, %v1209
        %v1214 = vpack.c.bf16 %v1212, %v1210
        %v1215 = vld [vmem:[#allocation7] sm:$0xff]
        %v1216 = vld [vmem:[#allocation7 + $0x8] sm:$0xff]
        %v1217 = vld [vmem:[#allocation7 + $0x10] sm:$0xff]
        %v1218 = vld [vmem:[#allocation7 + $0x18] sm:$0xff]
        %v1219 = vld [vmem:[#allocation7 + $0x20] sm:$0xff]
        %v1220 = vld [vmem:[#allocation7 + $0x28] sm:$0xff]
        %v1221 = vld [vmem:[#allocation7 + $0x30] sm:$0xff]
        %v1222 = vld [vmem:[#allocation7 + $0x38] sm:$0xff]
        %v1223 = vld [vmem:[#allocation7 + $0x40] sm:$0xff]
        %v1224 = vld [vmem:[#allocation7 + $0x48] sm:$0xff]
        %v1225 = vld [vmem:[#allocation7 + $0x50] sm:$0xff]
        %v1226 = vld [vmem:[#allocation7 + $0x58] sm:$0xff]
        %v1227 = vld [vmem:[#allocation7 + $0x60] sm:$0xff]
        %v1228 = vld [vmem:[#allocation7 + $0x68] sm:$0xff]
        %v1229 = vld [vmem:[#allocation7 + $0x70] sm:$0xff]
        %v1230 = vld [vmem:[#allocation7 + $0x78] sm:$0xff]
        %v1231 = vld [vmem:[#allocation7 + $0x80] sm:$0xff]
        %v1232 = vld [vmem:[#allocation7 + $0x88] sm:$0xff]
        %v1233 = vld [vmem:[#allocation7 + $0x90] sm:$0xff]
        %v1234 = vld [vmem:[#allocation7 + $0x98] sm:$0xff]
        %v1235 = vld [vmem:[#allocation7 + $0xa0] sm:$0xff]
        %v1236 = vld [vmem:[#allocation7 + $0xa8] sm:$0xff]
        %v1237 = vld [vmem:[#allocation7 + $0xb0] sm:$0xff]
        %v1238 = vld [vmem:[#allocation7 + $0xb8] sm:$0xff]
        %v1239 = vld [vmem:[#allocation7 + $0xc0] sm:$0xff]
        %v1240 = vld [vmem:[#allocation7 + $0xc8] sm:$0xff]
        %v1241 = vld [vmem:[#allocation7 + $0xd0] sm:$0xff]
        %v1242 = vld [vmem:[#allocation7 + $0xd8] sm:$0xff]
        %v1243 = vld [vmem:[#allocation7 + $0xe0] sm:$0xff]
        %v1244 = vld [vmem:[#allocation7 + $0xe8] sm:$0xff]
        %v1245 = vld [vmem:[#allocation7 + $0xf0] sm:$0xff]
        %v1246 = vld [vmem:[#allocation7 + $0xf8] sm:$0xff]
        %v1248 = vperm.slane %v767, 0
        %v1249 = vperm.slane %v767, 1
        %v1284 = vunpack.c.l.b16 %v1215
        %v1285 = vunpack.c.h.b16 %v1215
        %v1286 = vunpack.c.l.b16 %v1216
        %v1287 = vunpack.c.h.b16 %v1216
        %v1288 = vunpack.c.l.b16 %v1217
        %v1289 = vunpack.c.h.b16 %v1217
        %v1290 = vunpack.c.l.b16 %v1218
        %v1291 = vunpack.c.h.b16 %v1218
        %v1292 = vunpack.c.l.b16 %v1219
        %v1293 = vunpack.c.h.b16 %v1219
        %v1294 = vunpack.c.l.b16 %v1220
        %v1295 = vunpack.c.h.b16 %v1220
        %v1296 = vunpack.c.l.b16 %v1221
        %v1297 = vunpack.c.h.b16 %v1221
        %v1298 = vunpack.c.l.b16 %v1222
        %v1299 = vunpack.c.h.b16 %v1222
        %v1300 = vunpack.c.l.b16 %v1223
        %v1301 = vunpack.c.h.b16 %v1223
        %v1302 = vunpack.c.l.b16 %v1224
        %v1303 = vunpack.c.h.b16 %v1224
        %v1304 = vunpack.c.l.b16 %v1225
        %v1305 = vunpack.c.h.b16 %v1225
        %v1306 = vunpack.c.l.b16 %v1226
        %v1307 = vunpack.c.h.b16 %v1226
        %v1308 = vunpack.c.l.b16 %v1227
        %v1309 = vunpack.c.h.b16 %v1227
        %v1310 = vunpack.c.l.b16 %v1228
        %v1311 = vunpack.c.h.b16 %v1228
        %v1312 = vunpack.c.l.b16 %v1229
        %v1313 = vunpack.c.h.b16 %v1229
        %v1314 = vunpack.c.l.b16 %v1230
        %v1315 = vunpack.c.h.b16 %v1230
        %v1316 = vunpack.c.l.b16 %v1231
        %v1317 = vunpack.c.h.b16 %v1231
        %v1318 = vunpack.c.l.b16 %v1232
        %v1319 = vunpack.c.h.b16 %v1232
        %v1320 = vunpack.c.l.b16 %v1233
        %v1321 = vunpack.c.h.b16 %v1233
        %v1322 = vunpack.c.l.b16 %v1234
        %v1323 = vunpack.c.h.b16 %v1234
        %v1324 = vunpack.c.l.b16 %v1235
        %v1325 = vunpack.c.h.b16 %v1235
        %v1326 = vunpack.c.l.b16 %v1236
        %v1327 = vunpack.c.h.b16 %v1236
        %v1328 = vunpack.c.l.b16 %v1237
        %v1329 = vunpack.c.h.b16 %v1237
        %v1330 = vunpack.c.l.b16 %v1238
        %v1331 = vunpack.c.h.b16 %v1238
        %v1332 = vunpack.c.l.b16 %v1239
        %v1333 = vunpack.c.h.b16 %v1239
        %v1334 = vunpack.c.l.b16 %v1240
        %v1335 = vunpack.c.h.b16 %v1240
        %v1336 = vunpack.c.l.b16 %v1241
        %v1337 = vunpack.c.h.b16 %v1241
        %v1338 = vunpack.c.l.b16 %v1242
        %v1339 = vunpack.c.h.b16 %v1242
        %v1340 = vunpack.c.l.b16 %v1243
        %v1341 = vunpack.c.h.b16 %v1243
        %v1342 = vunpack.c.l.b16 %v1244
        %v1343 = vunpack.c.h.b16 %v1244
        %v1344 = vunpack.c.l.b16 %v1245
        %v1345 = vunpack.c.h.b16 %v1245
        %v1346 = vunpack.c.l.b16 %v1246
        %v1347 = vunpack.c.h.b16 %v1246
        %v1348 = vpack.c.b16 %v1286, %v1284
        %v1349 = vpack.c.b16 %v1287, %v1285
        %v1350 = vpack.c.b16 %v1290, %v1288
        %v1351 = vpack.c.b16 %v1291, %v1289
        %v1352 = vpack.c.b16 %v1294, %v1292
        %v1353 = vpack.c.b16 %v1295, %v1293
        %v1354 = vpack.c.b16 %v1298, %v1296
        %v1355 = vpack.c.b16 %v1299, %v1297
        %v1356 = vpack.c.b16 %v1302, %v1300
        %v1357 = vpack.c.b16 %v1303, %v1301
        %v1358 = vpack.c.b16 %v1306, %v1304
        %v1359 = vpack.c.b16 %v1307, %v1305
        %v1360 = vpack.c.b16 %v1310, %v1308
        %v1361 = vpack.c.b16 %v1311, %v1309
        %v1362 = vpack.c.b16 %v1314, %v1312
        %v1363 = vpack.c.b16 %v1315, %v1313
        %v1364 = vpack.c.b16 %v1318, %v1316
        %v1365 = vpack.c.b16 %v1319, %v1317
        %v1366 = vpack.c.b16 %v1322, %v1320
        %v1367 = vpack.c.b16 %v1323, %v1321
        %v1368 = vpack.c.b16 %v1326, %v1324
        %v1369 = vpack.c.b16 %v1327, %v1325
        %v1370 = vpack.c.b16 %v1330, %v1328
        %v1371 = vpack.c.b16 %v1331, %v1329
        %v1372 = vpack.c.b16 %v1334, %v1332
        %v1373 = vpack.c.b16 %v1335, %v1333
        %v1374 = vpack.c.b16 %v1338, %v1336
        %v1375 = vpack.c.b16 %v1339, %v1337
        %v1376 = vpack.c.b16 %v1342, %v1340
        %v1377 = vpack.c.b16 %v1343, %v1341
        %v1378 = vpack.c.b16 %v1346, %v1344
        %v1379 = vpack.c.b16 %v1347, %v1345
        %1412 = vmatpush.bf16.msra.mxu0 %v1362
        %1413 = vmatpush.bf16.msra.mxu0 %v1360
        %1414 = vmatpush.bf16.msra.mxu0 %v1358
        %1415 = vmatpush.bf16.msra.mxu0 %v1356
        %1416 = vmatpush.bf16.msra.mxu0 %v1354
        %1417 = vmatpush.bf16.msra.mxu0 %v1352
        %1418 = vmatpush.bf16.msra.mxu0 %v1350
        %1419 = vmatpush.bf16.msra.mxu0 %v1348
        %1420 = vmatmul.bf16.gmra.mxu0 %v1213
        %v1421 = vpop.f32.mrf.mxu0
        %v1422 = vadd.f32 %v1248, %v1421
        %v1423 = vpop.f32.mrf.mxu0
        %v1424 = vadd.f32 %v1248, %v1423
        %1425 = vdwg.mxu0
        %1426 = vmatpush.bf16.msra.mxu0 %v1378
        %1427 = vmatpush.bf16.msra.mxu0 %v1376
        %1428 = vmatpush.bf16.msra.mxu0 %v1374
        %1429 = vmatpush.bf16.msra.mxu0 %v1372
        %1430 = vmatpush.bf16.msra.mxu0 %v1370
        %1431 = vmatpush.bf16.msra.mxu0 %v1368
        %1432 = vmatpush.bf16.msra.mxu0 %v1366
        %1433 = vmatpush.bf16.msra.mxu0 %v1364
        %1434 = vmatmul.bf16.gmra.mxu0 %v1214
        %v1435 = vpop.f32.mrf.mxu0
        %v1436 = vadd.f32 %v1422, %v1435
        %v1437 = vpop.f32.mrf.mxu0
        %v1438 = vadd.f32 %v1424, %v1437
        %1439 = vdwg.mxu0
        %1440 = vmatpush.bf16.msra.mxu0 %v1363
        %1441 = vmatpush.bf16.msra.mxu0 %v1361
        %1442 = vmatpush.bf16.msra.mxu0 %v1359
        %1443 = vmatpush.bf16.msra.mxu0 %v1357
        %1444 = vmatpush.bf16.msra.mxu0 %v1355
        %1445 = vmatpush.bf16.msra.mxu0 %v1353
        %1446 = vmatpush.bf16.msra.mxu0 %v1351
        %1447 = vmatpush.bf16.msra.mxu0 %v1349
        %1448 = vmatmul.bf16.gmra.mxu0 %v1213
        %v1449 = vpop.f32.mrf.mxu0
        %v1450 = vadd.f32 %v1249, %v1449
        %v1451 = vpop.f32.mrf.mxu0
        %v1452 = vadd.f32 %v1249, %v1451
        %1453 = vdwg.mxu0
        %1454 = vmatpush.bf16.msra.mxu0 %v1379
        %1455 = vmatpush.bf16.msra.mxu0 %v1377
        %1456 = vmatpush.bf16.msra.mxu0 %v1375
        %1457 = vmatpush.bf16.msra.mxu0 %v1373
        %1458 = vmatpush.bf16.msra.mxu0 %v1371
        %1459 = vmatpush.bf16.msra.mxu0 %v1369
        %1460 = vmatpush.bf16.msra.mxu0 %v1367
        %1461 = vmatpush.bf16.msra.mxu0 %v1365
        %1462 = vmatmul.bf16.gmra.mxu0 %v1214
        %v1463 = vpop.f32.mrf.mxu0
        %v1464 = vadd.f32 %v1450, %v1463
        %v1465 = vpop.f32.mrf.mxu0
        %v1466 = vadd.f32 %v1452, %v1465
        %1467 = vdwg.mxu0
        %v1468 = vmul.f32 %v1436, 0.01
        %v1469 = vmul.f32 %v1464, 0.01
        %v1470 = vmul.f32 %v1438, 0.01
        %v1471 = vmul.f32 %v1466, 0.01
        %v1472 = vmax.f32 %v1436, %v1468
        %v1473 = vmax.f32 %v1464, %v1469
        %v1474 = vmax.f32 %v1438, %v1470
        %v1475 = vmax.f32 %v1466, %v1471
        %v1476 = vadd.f32 %v1181, %v1472
        %v1477 = vadd.f32 %v1182, %v1473
        %v1478 = vadd.f32 %v1183, %v1474
        %v1479 = vadd.f32 %v1184, %v1475
        %v1480 = vmul.f32 %v1194, %v1476
        %v1481 = vmul.f32 %v1195, %v1477
        %v1482 = vmul.f32 %v1196, %v1478
        %v1483 = vmul.f32 %v1197, %v1479
        %v1484 = vpack.c.bf16 %v1482, %v1480
        %v1485 = vpack.c.bf16 %v1483, %v1481
        %v1486 = vld [vmem:[#allocation10] sm:$0xff]
        %v1487 = vld [vmem:[#allocation10 + $0x8] sm:$0xff]
        %v1488 = vld [vmem:[#allocation10 + $0x10] sm:$0xff]
        %v1489 = vld [vmem:[#allocation10 + $0x18] sm:$0xff]
        %v1490 = vld [vmem:[#allocation10 + $0x20] sm:$0xff]
        %v1491 = vld [vmem:[#allocation10 + $0x28] sm:$0xff]
        %v1492 = vld [vmem:[#allocation10 + $0x30] sm:$0xff]
        %v1493 = vld [vmem:[#allocation10 + $0x38] sm:$0xff]
        %v1494 = vld [vmem:[#allocation10 + $0x40] sm:$0xff]
        %v1495 = vld [vmem:[#allocation10 + $0x48] sm:$0xff]
        %v1496 = vld [vmem:[#allocation10 + $0x50] sm:$0xff]
        %v1497 = vld [vmem:[#allocation10 + $0x58] sm:$0xff]
        %v1498 = vld [vmem:[#allocation10 + $0x60] sm:$0xff]
        %v1499 = vld [vmem:[#allocation10 + $0x68] sm:$0xff]
        %v1500 = vld [vmem:[#allocation10 + $0x70] sm:$0xff]
        %v1501 = vld [vmem:[#allocation10 + $0x78] sm:$0xff]
        %v1502 = vld [vmem:[#allocation10 + $0x80] sm:$0xff]
        %v1503 = vld [vmem:[#allocation10 + $0x88] sm:$0xff]
        %v1504 = vld [vmem:[#allocation10 + $0x90] sm:$0xff]
        %v1505 = vld [vmem:[#allocation10 + $0x98] sm:$0xff]
        %v1506 = vld [vmem:[#allocation10 + $0xa0] sm:$0xff]
        %v1507 = vld [vmem:[#allocation10 + $0xa8] sm:$0xff]
        %v1508 = vld [vmem:[#allocation10 + $0xb0] sm:$0xff]
        %v1509 = vld [vmem:[#allocation10 + $0xb8] sm:$0xff]
        %v1510 = vld [vmem:[#allocation10 + $0xc0] sm:$0xff]
        %v1511 = vld [vmem:[#allocation10 + $0xc8] sm:$0xff]
        %v1512 = vld [vmem:[#allocation10 + $0xd0] sm:$0xff]
        %v1513 = vld [vmem:[#allocation10 + $0xd8] sm:$0xff]
        %v1514 = vld [vmem:[#allocation10 + $0xe0] sm:$0xff]
        %v1515 = vld [vmem:[#allocation10 + $0xe8] sm:$0xff]
        %v1516 = vld [vmem:[#allocation10 + $0xf0] sm:$0xff]
        %v1517 = vld [vmem:[#allocation10 + $0xf8] sm:$0xff]
        %v1519 = vperm.slane %v768, 0
        %v1520 = vperm.slane %v768, 1
        %v1555 = vunpack.c.l.b16 %v1486
        %v1556 = vunpack.c.h.b16 %v1486
        %v1557 = vunpack.c.l.b16 %v1487
        %v1558 = vunpack.c.h.b16 %v1487
        %v1559 = vunpack.c.l.b16 %v1488
        %v1560 = vunpack.c.h.b16 %v1488
        %v1561 = vunpack.c.l.b16 %v1489
        %v1562 = vunpack.c.h.b16 %v1489
        %v1563 = vunpack.c.l.b16 %v1490
        %v1564 = vunpack.c.h.b16 %v1490
        %v1565 = vunpack.c.l.b16 %v1491
        %v1566 = vunpack.c.h.b16 %v1491
        %v1567 = vunpack.c.l.b16 %v1492
        %v1568 = vunpack.c.h.b16 %v1492
        %v1569 = vunpack.c.l.b16 %v1493
        %v1570 = vunpack.c.h.b16 %v1493
        %v1571 = vunpack.c.l.b16 %v1494
        %v1572 = vunpack.c.h.b16 %v1494
        %v1573 = vunpack.c.l.b16 %v1495
        %v1574 = vunpack.c.h.b16 %v1495
        %v1575 = vunpack.c.l.b16 %v1496
        %v1576 = vunpack.c.h.b16 %v1496
        %v1577 = vunpack.c.l.b16 %v1497
        %v1578 = vunpack.c.h.b16 %v1497
        %v1579 = vunpack.c.l.b16 %v1498
        %v1580 = vunpack.c.h.b16 %v1498
        %v1581 = vunpack.c.l.b16 %v1499
        %v1582 = vunpack.c.h.b16 %v1499
        %v1583 = vunpack.c.l.b16 %v1500
        %v1584 = vunpack.c.h.b16 %v1500
        %v1585 = vunpack.c.l.b16 %v1501
        %v1586 = vunpack.c.h.b16 %v1501
        %v1587 = vunpack.c.l.b16 %v1502
        %v1588 = vunpack.c.h.b16 %v1502
        %v1589 = vunpack.c.l.b16 %v1503
        %v1590 = vunpack.c.h.b16 %v1503
        %v1591 = vunpack.c.l.b16 %v1504
        %v1592 = vunpack.c.h.b16 %v1504
        %v1593 = vunpack.c.l.b16 %v1505
        %v1594 = vunpack.c.h.b16 %v1505
        %v1595 = vunpack.c.l.b16 %v1506
        %v1596 = vunpack.c.h.b16 %v1506
        %v1597 = vunpack.c.l.b16 %v1507
        %v1598 = vunpack.c.h.b16 %v1507
        %v1599 = vunpack.c.l.b16 %v1508
        %v1600 = vunpack.c.h.b16 %v1508
        %v1601 = vunpack.c.l.b16 %v1509
        %v1602 = vunpack.c.h.b16 %v1509
        %v1603 = vunpack.c.l.b16 %v1510
        %v1604 = vunpack.c.h.b16 %v1510
        %v1605 = vunpack.c.l.b16 %v1511
        %v1606 = vunpack.c.h.b16 %v1511
        %v1607 = vunpack.c.l.b16 %v1512
        %v1608 = vunpack.c.h.b16 %v1512
        %v1609 = vunpack.c.l.b16 %v1513
        %v1610 = vunpack.c.h.b16 %v1513
        %v1611 = vunpack.c.l.b16 %v1514
        %v1612 = vunpack.c.h.b16 %v1514
        %v1613 = vunpack.c.l.b16 %v1515
        %v1614 = vunpack.c.h.b16 %v1515
        %v1615 = vunpack.c.l.b16 %v1516
        %v1616 = vunpack.c.h.b16 %v1516
        %v1617 = vunpack.c.l.b16 %v1517
        %v1618 = vunpack.c.h.b16 %v1517
        %v1619 = vpack.c.b16 %v1557, %v1555
        %v1620 = vpack.c.b16 %v1558, %v1556
        %v1621 = vpack.c.b16 %v1561, %v1559
        %v1622 = vpack.c.b16 %v1562, %v1560
        %v1623 = vpack.c.b16 %v1565, %v1563
        %v1624 = vpack.c.b16 %v1566, %v1564
        %v1625 = vpack.c.b16 %v1569, %v1567
        %v1626 = vpack.c.b16 %v1570, %v1568
        %v1627 = vpack.c.b16 %v1573, %v1571
        %v1628 = vpack.c.b16 %v1574, %v1572
        %v1629 = vpack.c.b16 %v1577, %v1575
        %v1630 = vpack.c.b16 %v1578, %v1576
        %v1631 = vpack.c.b16 %v1581, %v1579
        %v1632 = vpack.c.b16 %v1582, %v1580
        %v1633 = vpack.c.b16 %v1585, %v1583
        %v1634 = vpack.c.b16 %v1586, %v1584
        %v1635 = vpack.c.b16 %v1589, %v1587
        %v1636 = vpack.c.b16 %v1590, %v1588
        %v1637 = vpack.c.b16 %v1593, %v1591
        %v1638 = vpack.c.b16 %v1594, %v1592
        %v1639 = vpack.c.b16 %v1597, %v1595
        %v1640 = vpack.c.b16 %v1598, %v1596
        %v1641 = vpack.c.b16 %v1601, %v1599
        %v1642 = vpack.c.b16 %v1602, %v1600
        %v1643 = vpack.c.b16 %v1605, %v1603
        %v1644 = vpack.c.b16 %v1606, %v1604
        %v1645 = vpack.c.b16 %v1609, %v1607
        %v1646 = vpack.c.b16 %v1610, %v1608
        %v1647 = vpack.c.b16 %v1613, %v1611
        %v1648 = vpack.c.b16 %v1614, %v1612
        %v1649 = vpack.c.b16 %v1617, %v1615
        %v1650 = vpack.c.b16 %v1618, %v1616
        %1683 = vmatpush.bf16.msra.mxu0 %v1633
        %1684 = vmatpush.bf16.msra.mxu0 %v1631
        %1685 = vmatpush.bf16.msra.mxu0 %v1629
        %1686 = vmatpush.bf16.msra.mxu0 %v1627
        %1687 = vmatpush.bf16.msra.mxu0 %v1625
        %1688 = vmatpush.bf16.msra.mxu0 %v1623
        %1689 = vmatpush.bf16.msra.mxu0 %v1621
        %1690 = vmatpush.bf16.msra.mxu0 %v1619
        %1691 = vmatmul.bf16.gmra.mxu0 %v1484
        %v1692 = vpop.f32.mrf.mxu0
        %v1693 = vadd.f32 %v1519, %v1692
        %v1694 = vpop.f32.mrf.mxu0
        %v1695 = vadd.f32 %v1519, %v1694
        %1696 = vdwg.mxu0
        %1697 = vmatpush.bf16.msra.mxu0 %v1649
        %1698 = vmatpush.bf16.msra.mxu0 %v1647
        %1699 = vmatpush.bf16.msra.mxu0 %v1645
        %1700 = vmatpush.bf16.msra.mxu0 %v1643
        %1701 = vmatpush.bf16.msra.mxu0 %v1641
        %1702 = vmatpush.bf16.msra.mxu0 %v1639
        %1703 = vmatpush.bf16.msra.mxu0 %v1637
        %1704 = vmatpush.bf16.msra.mxu0 %v1635
        %1705 = vmatmul.bf16.gmra.mxu0 %v1485
        %v1706 = vpop.f32.mrf.mxu0
        %v1707 = vadd.f32 %v1693, %v1706
        %v1708 = vpop.f32.mrf.mxu0
        %v1709 = vadd.f32 %v1695, %v1708
        %1710 = vdwg.mxu0
        %1711 = vmatpush.bf16.msra.mxu0 %v1634
        %1712 = vmatpush.bf16.msra.mxu0 %v1632
        %1713 = vmatpush.bf16.msra.mxu0 %v1630
        %1714 = vmatpush.bf16.msra.mxu0 %v1628
        %1715 = vmatpush.bf16.msra.mxu0 %v1626
        %1716 = vmatpush.bf16.msra.mxu0 %v1624
        %1717 = vmatpush.bf16.msra.mxu0 %v1622
        %1718 = vmatpush.bf16.msra.mxu0 %v1620
        %1719 = vmatmul.bf16.gmra.mxu0 %v1484
        %v1720 = vpop.f32.mrf.mxu0
        %v1721 = vadd.f32 %v1520, %v1720
        %v1722 = vpop.f32.mrf.mxu0
        %v1723 = vadd.f32 %v1520, %v1722
        %1724 = vdwg.mxu0
        %1725 = vmatpush.bf16.msra.mxu0 %v1650
        %1726 = vmatpush.bf16.msra.mxu0 %v1648
        %1727 = vmatpush.bf16.msra.mxu0 %v1646
        %1728 = vmatpush.bf16.msra.mxu0 %v1644
        %1729 = vmatpush.bf16.msra.mxu0 %v1642
        %1730 = vmatpush.bf16.msra.mxu0 %v1640
        %1731 = vmatpush.bf16.msra.mxu0 %v1638
        %1732 = vmatpush.bf16.msra.mxu0 %v1636
        %1733 = vmatmul.bf16.gmra.mxu0 %v1485
        %v1734 = vpop.f32.mrf.mxu0
        %v1735 = vadd.f32 %v1721, %v1734
        %v1736 = vpop.f32.mrf.mxu0
        %v1737 = vadd.f32 %v1723, %v1736
        %1738 = vdwg.mxu0
        %v1739 = vmul.f32 %v1707, 0.01
        %v1740 = vmul.f32 %v1735, 0.01
        %v1741 = vmul.f32 %v1709, 0.01
        %v1742 = vmul.f32 %v1737, 0.01
        %v1743 = vmax.f32 %v1707, %v1739
        %v1744 = vmax.f32 %v1735, %v1740
        %v1745 = vmax.f32 %v1709, %v1741
        %v1746 = vmax.f32 %v1737, %v1742
        %v1747 = vpack.c.bf16 %v1745, %v1743
        %v1748 = vpack.c.bf16 %v1746, %v1744
        %v1749 = vld [vmem:[#allocation13] sm:$0xff]
        %v1750 = vld [vmem:[#allocation13 + $0x8] sm:$0xff]
        %v1751 = vld [vmem:[#allocation13 + $0x10] sm:$0xff]
        %v1752 = vld [vmem:[#allocation13 + $0x18] sm:$0xff]
        %v1753 = vld [vmem:[#allocation13 + $0x20] sm:$0xff]
        %v1754 = vld [vmem:[#allocation13 + $0x28] sm:$0xff]
        %v1755 = vld [vmem:[#allocation13 + $0x30] sm:$0xff]
        %v1756 = vld [vmem:[#allocation13 + $0x38] sm:$0xff]
        %v1757 = vld [vmem:[#allocation13 + $0x40] sm:$0xff]
        %v1758 = vld [vmem:[#allocation13 + $0x48] sm:$0xff]
        %v1759 = vld [vmem:[#allocation13 + $0x50] sm:$0xff]
        %v1760 = vld [vmem:[#allocation13 + $0x58] sm:$0xff]
        %v1761 = vld [vmem:[#allocation13 + $0x60] sm:$0xff]
        %v1762 = vld [vmem:[#allocation13 + $0x68] sm:$0xff]
        %v1763 = vld [vmem:[#allocation13 + $0x70] sm:$0xff]
        %v1764 = vld [vmem:[#allocation13 + $0x78] sm:$0xff]
        %v1765 = vld [vmem:[#allocation13 + $0x80] sm:$0xff]
        %v1766 = vld [vmem:[#allocation13 + $0x88] sm:$0xff]
        %v1767 = vld [vmem:[#allocation13 + $0x90] sm:$0xff]
        %v1768 = vld [vmem:[#allocation13 + $0x98] sm:$0xff]
        %v1769 = vld [vmem:[#allocation13 + $0xa0] sm:$0xff]
        %v1770 = vld [vmem:[#allocation13 + $0xa8] sm:$0xff]
        %v1771 = vld [vmem:[#allocation13 + $0xb0] sm:$0xff]
        %v1772 = vld [vmem:[#allocation13 + $0xb8] sm:$0xff]
        %v1773 = vld [vmem:[#allocation13 + $0xc0] sm:$0xff]
        %v1774 = vld [vmem:[#allocation13 + $0xc8] sm:$0xff]
        %v1775 = vld [vmem:[#allocation13 + $0xd0] sm:$0xff]
        %v1776 = vld [vmem:[#allocation13 + $0xd8] sm:$0xff]
        %v1777 = vld [vmem:[#allocation13 + $0xe0] sm:$0xff]
        %v1778 = vld [vmem:[#allocation13 + $0xe8] sm:$0xff]
        %v1779 = vld [vmem:[#allocation13 + $0xf0] sm:$0xff]
        %v1780 = vld [vmem:[#allocation13 + $0xf8] sm:$0xff]
        %v1782 = vperm.slane %v769, 0
        %v1783 = vperm.slane %v769, 1
        %v1818 = vunpack.c.l.b16 %v1749
        %v1819 = vunpack.c.h.b16 %v1749
        %v1820 = vunpack.c.l.b16 %v1750
        %v1821 = vunpack.c.h.b16 %v1750
        %v1822 = vunpack.c.l.b16 %v1751
        %v1823 = vunpack.c.h.b16 %v1751
        %v1824 = vunpack.c.l.b16 %v1752
        %v1825 = vunpack.c.h.b16 %v1752
        %v1826 = vunpack.c.l.b16 %v1753
        %v1827 = vunpack.c.h.b16 %v1753
        %v1828 = vunpack.c.l.b16 %v1754
        %v1829 = vunpack.c.h.b16 %v1754
        %v1830 = vunpack.c.l.b16 %v1755
        %v1831 = vunpack.c.h.b16 %v1755
        %v1832 = vunpack.c.l.b16 %v1756
        %v1833 = vunpack.c.h.b16 %v1756
        %v1834 = vunpack.c.l.b16 %v1757
        %v1835 = vunpack.c.h.b16 %v1757
        %v1836 = vunpack.c.l.b16 %v1758
        %v1837 = vunpack.c.h.b16 %v1758
        %v1838 = vunpack.c.l.b16 %v1759
        %v1839 = vunpack.c.h.b16 %v1759
        %v1840 = vunpack.c.l.b16 %v1760
        %v1841 = vunpack.c.h.b16 %v1760
        %v1842 = vunpack.c.l.b16 %v1761
        %v1843 = vunpack.c.h.b16 %v1761
        %v1844 = vunpack.c.l.b16 %v1762
        %v1845 = vunpack.c.h.b16 %v1762
        %v1846 = vunpack.c.l.b16 %v1763
        %v1847 = vunpack.c.h.b16 %v1763
        %v1848 = vunpack.c.l.b16 %v1764
        %v1849 = vunpack.c.h.b16 %v1764
        %v1850 = vunpack.c.l.b16 %v1765
        %v1851 = vunpack.c.h.b16 %v1765
        %v1852 = vunpack.c.l.b16 %v1766
        %v1853 = vunpack.c.h.b16 %v1766
        %v1854 = vunpack.c.l.b16 %v1767
        %v1855 = vunpack.c.h.b16 %v1767
        %v1856 = vunpack.c.l.b16 %v1768
        %v1857 = vunpack.c.h.b16 %v1768
        %v1858 = vunpack.c.l.b16 %v1769
        %v1859 = vunpack.c.h.b16 %v1769
        %v1860 = vunpack.c.l.b16 %v1770
        %v1861 = vunpack.c.h.b16 %v1770
        %v1862 = vunpack.c.l.b16 %v1771
        %v1863 = vunpack.c.h.b16 %v1771
        %v1864 = vunpack.c.l.b16 %v1772
        %v1865 = vunpack.c.h.b16 %v1772
        %v1866 = vunpack.c.l.b16 %v1773
        %v1867 = vunpack.c.h.b16 %v1773
        %v1868 = vunpack.c.l.b16 %v1774
        %v1869 = vunpack.c.h.b16 %v1774
        %v1870 = vunpack.c.l.b16 %v1775
        %v1871 = vunpack.c.h.b16 %v1775
        %v1872 = vunpack.c.l.b16 %v1776
        %v1873 = vunpack.c.h.b16 %v1776
        %v1874 = vunpack.c.l.b16 %v1777
        %v1875 = vunpack.c.h.b16 %v1777
        %v1876 = vunpack.c.l.b16 %v1778
        %v1877 = vunpack.c.h.b16 %v1778
        %v1878 = vunpack.c.l.b16 %v1779
        %v1879 = vunpack.c.h.b16 %v1779
        %v1880 = vunpack.c.l.b16 %v1780
        %v1881 = vunpack.c.h.b16 %v1780
        %v1882 = vpack.c.b16 %v1820, %v1818
        %v1883 = vpack.c.b16 %v1821, %v1819
        %v1884 = vpack.c.b16 %v1824, %v1822
        %v1885 = vpack.c.b16 %v1825, %v1823
        %v1886 = vpack.c.b16 %v1828, %v1826
        %v1887 = vpack.c.b16 %v1829, %v1827
        %v1888 = vpack.c.b16 %v1832, %v1830
        %v1889 = vpack.c.b16 %v1833, %v1831
        %v1890 = vpack.c.b16 %v1836, %v1834
        %v1891 = vpack.c.b16 %v1837, %v1835
        %v1892 = vpack.c.b16 %v1840, %v1838
        %v1893 = vpack.c.b16 %v1841, %v1839
        %v1894 = vpack.c.b16 %v1844, %v1842
        %v1895 = vpack.c.b16 %v1845, %v1843
        %v1896 = vpack.c.b16 %v1848, %v1846
        %v1897 = vpack.c.b16 %v1849, %v1847
        %v1898 = vpack.c.b16 %v1852, %v1850
        %v1899 = vpack.c.b16 %v1853, %v1851
        %v1900 = vpack.c.b16 %v1856, %v1854
        %v1901 = vpack.c.b16 %v1857, %v1855
        %v1902 = vpack.c.b16 %v1860, %v1858
        %v1903 = vpack.c.b16 %v1861, %v1859
        %v1904 = vpack.c.b16 %v1864, %v1862
        %v1905 = vpack.c.b16 %v1865, %v1863
        %v1906 = vpack.c.b16 %v1868, %v1866
        %v1907 = vpack.c.b16 %v1869, %v1867
        %v1908 = vpack.c.b16 %v1872, %v1870
        %v1909 = vpack.c.b16 %v1873, %v1871
        %v1910 = vpack.c.b16 %v1876, %v1874
        %v1911 = vpack.c.b16 %v1877, %v1875
        %v1912 = vpack.c.b16 %v1880, %v1878
        %v1913 = vpack.c.b16 %v1881, %v1879
        %1946 = vmatpush.bf16.msra.mxu0 %v1896
        %1947 = vmatpush.bf16.msra.mxu0 %v1894
        %1948 = vmatpush.bf16.msra.mxu0 %v1892
        %1949 = vmatpush.bf16.msra.mxu0 %v1890
        %1950 = vmatpush.bf16.msra.mxu0 %v1888
        %1951 = vmatpush.bf16.msra.mxu0 %v1886
        %1952 = vmatpush.bf16.msra.mxu0 %v1884
        %1953 = vmatpush.bf16.msra.mxu0 %v1882
        %1954 = vmatmul.bf16.gmra.mxu0 %v1747
        %v1955 = vpop.f32.mrf.mxu0
        %v1956 = vadd.f32 %v1782, %v1955
        %v1957 = vpop.f32.mrf.mxu0
        %v1958 = vadd.f32 %v1782, %v1957
        %1959 = vdwg.mxu0
        %1960 = vmatpush.bf16.msra.mxu0 %v1912
        %1961 = vmatpush.bf16.msra.mxu0 %v1910
        %1962 = vmatpush.bf16.msra.mxu0 %v1908
        %1963 = vmatpush.bf16.msra.mxu0 %v1906
        %1964 = vmatpush.bf16.msra.mxu0 %v1904
        %1965 = vmatpush.bf16.msra.mxu0 %v1902
        %1966 = vmatpush.bf16.msra.mxu0 %v1900
        %1967 = vmatpush.bf16.msra.mxu0 %v1898
        %1968 = vmatmul.bf16.gmra.mxu0 %v1748
        %v1969 = vpop.f32.mrf.mxu0
        %v1970 = vadd.f32 %v1956, %v1969
        %v1971 = vpop.f32.mrf.mxu0
        %v1972 = vadd.f32 %v1958, %v1971
        %1973 = vdwg.mxu0
        %1974 = vmatpush.bf16.msra.mxu0 %v1897
        %1975 = vmatpush.bf16.msra.mxu0 %v1895
        %1976 = vmatpush.bf16.msra.mxu0 %v1893
        %1977 = vmatpush.bf16.msra.mxu0 %v1891
        %1978 = vmatpush.bf16.msra.mxu0 %v1889
        %1979 = vmatpush.bf16.msra.mxu0 %v1887
        %1980 = vmatpush.bf16.msra.mxu0 %v1885
        %1981 = vmatpush.bf16.msra.mxu0 %v1883
        %1982 = vmatmul.bf16.gmra.mxu0 %v1747
        %v1983 = vpop.f32.mrf.mxu0
        %v1984 = vadd.f32 %v1783, %v1983
        %v1985 = vpop.f32.mrf.mxu0
        %v1986 = vadd.f32 %v1783, %v1985
        %1987 = vdwg.mxu0
        %1988 = vmatpush.bf16.msra.mxu0 %v1913
        %1989 = vmatpush.bf16.msra.mxu0 %v1911
        %1990 = vmatpush.bf16.msra.mxu0 %v1909
        %1991 = vmatpush.bf16.msra.mxu0 %v1907
        %1992 = vmatpush.bf16.msra.mxu0 %v1905
        %1993 = vmatpush.bf16.msra.mxu0 %v1903
        %1994 = vmatpush.bf16.msra.mxu0 %v1901
        %1995 = vmatpush.bf16.msra.mxu0 %v1899
        %1996 = vmatmul.bf16.gmra.mxu0 %v1748
        %v1997 = vpop.f32.mrf.mxu0
        %v1998 = vadd.f32 %v1984, %v1997
        %v1999 = vpop.f32.mrf.mxu0
        %v2000 = vadd.f32 %v1986, %v1999
        %2001 = vdwg.mxu0
        %v2002 = vmul.f32 %v1970, 0.01
        %v2003 = vmul.f32 %v1998, 0.01
        %v2004 = vmul.f32 %v1972, 0.01
        %v2005 = vmul.f32 %v2000, 0.01
        %v2006 = vmax.f32 %v1970, %v2002
        %v2007 = vmax.f32 %v1998, %v2003
        %v2008 = vmax.f32 %v1972, %v2004
        %v2009 = vmax.f32 %v2000, %v2005
        %2012 = vrot.lane.b32.xlu0 %v2006, 64
        %v2013 = vpop.permute.xlu0 %2012
        %2014 = vrot.lane.b32.xlu0 %v2008, 64
        %v2015 = vpop.permute.xlu0 %2014
        %v2018 = vmax.f32 %v2006, %v2013
        %v2019 = vmax.f32 %v2008, %v2015
        %v2020 = vmax.f32 %v2018, %v2007
        %v2021 = vmax.f32 %v2019, %v2009
        %2024 = vrot.lane.b32.xlu0 %v2007, 64
        %v2025 = vpop.permute.xlu0 %2024
        %2026 = vrot.lane.b32.xlu0 %v2009, 64
        %v2027 = vpop.permute.xlu0 %2026
        %v2030 = vmax.f32 %v2020, %v2025
        %v2031 = vmax.f32 %v2021, %v2027
        %v2032 = vld [vmem:[#allocation6] sm:$0xff]
        %v2033 = vld [vmem:[#allocation6 + $0x8] sm:$0xff]
        %v2034 = vld [vmem:[#allocation6 + $0x10] sm:$0xff]
        %v2035 = vld [vmem:[#allocation6 + $0x18] sm:$0xff]
        %v2036 = vld [vmem:[#allocation6 + $0x20] sm:$0xff]
        %v2037 = vld [vmem:[#allocation6 + $0x28] sm:$0xff]
        %v2038 = vld [vmem:[#allocation6 + $0x30] sm:$0xff]
        %v2039 = vld [vmem:[#allocation6 + $0x38] sm:$0xff]
        %v2040 = vld [vmem:[#allocation6 + $0x40] sm:$0xff]
        %v2041 = vld [vmem:[#allocation6 + $0x48] sm:$0xff]
        %v2042 = vld [vmem:[#allocation6 + $0x50] sm:$0x77]
        %v2045 = vunpack.c.l.b16 %v762
        %v2046 = vunpack.c.l.b16 %v764
        %v2047 = vpack.c.b16 %v2046, %v2045
        %2048 = vrot.lane.b32.xlu0 %v821, 84
        %v2049 = vpop.permute.xlu0 %2048
        %2050 = vrot.lane.b32.xlu0 %v2047, 84
        %v2051 = vpop.permute.xlu0 %2050
        %vm2052 = vcmask 687104
        %v2053 = vsel %vm2052, %v2049, %v2051
        %v2065 = vunpack.c.l.b16 %v2032
        %v2066 = vunpack.c.h.b16 %v2032
        %v2067 = vunpack.c.l.b16 %v2033
        %v2068 = vunpack.c.h.b16 %v2033
        %v2069 = vunpack.c.l.b16 %v2034
        %v2070 = vunpack.c.h.b16 %v2034
        %v2071 = vunpack.c.l.b16 %v2035
        %v2072 = vunpack.c.h.b16 %v2035
        %v2073 = vunpack.c.l.b16 %v2036
        %v2074 = vunpack.c.h.b16 %v2036
        %v2075 = vunpack.c.l.b16 %v2037
        %v2076 = vunpack.c.h.b16 %v2037
        %v2077 = vunpack.c.l.b16 %v2038
        %v2078 = vunpack.c.h.b16 %v2038
        %v2079 = vunpack.c.l.b16 %v2039
        %v2080 = vunpack.c.h.b16 %v2039
        %v2081 = vunpack.c.l.b16 %v2040
        %v2082 = vunpack.c.h.b16 %v2040
        %v2083 = vunpack.c.l.b16 %v2041
        %v2084 = vunpack.c.h.b16 %v2041
        %v2085 = vunpack.c.l.b16 %v2042
        %v2086 = vunpack.c.h.b16 %v2042
        %v2087 = vpack.c.b16 %v2067, %v2065
        %v2088 = vpack.c.b16 %v2068, %v2066
        %v2089 = vpack.c.b16 %v2071, %v2069
        %v2090 = vpack.c.b16 %v2072, %v2070
        %v2091 = vpack.c.b16 %v2075, %v2073
        %v2092 = vpack.c.b16 %v2076, %v2074
        %v2093 = vpack.c.b16 %v2079, %v2077
        %v2094 = vpack.c.b16 %v2080, %v2078
        %v2095 = vpack.c.b16 %v2083, %v2081
        %v2096 = vpack.c.b16 %v2084, %v2082
        %v2097 = vpack.c.b16 %v2085, %v2085
        %v2098 = vpack.c.b16 %v2086, %v2086
        %vm2109 = vcmask 703488
        %v2111 = vsel %vm2109, %v2053, 0
        %vm2113 = vcmask 1042432
        %v2115 = vsel %vm2113, %v2097, 0
        %v2118 = vsel %vm2113, %v2098, 0
        %2120 = vmatpush.bf16.msra.mxu0 0
        %2121 = vmatpush.bf16.msra.mxu0 0
        %2122 = vmatpush.bf16.msra.mxu0 %v2115
        %2123 = vmatpush.bf16.msra.mxu0 %v2095
        %2124 = vmatpush.bf16.msra.mxu0 %v2093
        %2125 = vmatpush.bf16.msra.mxu0 %v2091
        %2126 = vmatpush.bf16.msra.mxu0 %v2089
        %2127 = vmatpush.bf16.msra.mxu0 %v2087
        %2128 = vmatmul.bf16.gmra.mxu0 %v2111
        %v2129 = vpop.f32.mrf.mxu0
        %v2130 = vadd.f32 0.0, %v2129
        %v2131 = vpop.f32.mrf.mxu0
        %v2132 = vadd.f32 0.0, %v2131
        %2133 = vdwg.mxu0
        %2134 = vmatpush.bf16.msra.mxu0 0
        %2135 = vmatpush.bf16.msra.mxu0 0
        %2136 = vmatpush.bf16.msra.mxu0 %v2118
        %2137 = vmatpush.bf16.msra.mxu0 %v2096
        %2138 = vmatpush.bf16.msra.mxu0 %v2094
        %2139 = vmatpush.bf16.msra.mxu0 %v2092
        %2140 = vmatpush.bf16.msra.mxu0 %v2090
        %2141 = vmatpush.bf16.msra.mxu0 %v2088
        %2142 = vmatmul.bf16.gmra.mxu0 %v2111
        %v2143 = vpop.f32.mrf.mxu0
        %v2144 = vadd.f32 0.0, %v2143
        %v2145 = vpop.f32.mrf.mxu0
        %v2146 = vadd.f32 0.0, %v2145
        %2147 = vdwg.mxu0
        %v2148 = vadd.f32 %v2130, %v1169
        %v2149 = vadd.f32 %v2132, %v1169
        %v2150 = vmul.f32 %v2148, 0.01
        %v2151 = vmul.f32 %v2149, 0.01
        %v2152 = vmax.f32 %v2148, %v2150
        %v2153 = vmax.f32 %v2149, %v2151
        %v2154 = vadd.f32 %v2144, %v1186
        %v2155 = vadd.f32 %v2146, %v1186
        %v2156 = vtanh.pop %v2154
        %v2157 = vtanh.pop %v2155
        %v2158 = vsub.f32 %v2152, %v1207
        %v2159 = vsub.f32 %v2153, %v1208
        %v2160 = vpack.c.bf16 %v2159, %v2158
        %v2161 = vld [vmem:[#allocation9] sm:$0xf]
        %v2162 = vld [vmem:[#allocation9 + $0x4] sm:$0xf]
        %v2163 = vld [vmem:[#allocation9 + $0x8] sm:$0xf]
        %v2164 = vld [vmem:[#allocation9 + $0xc] sm:$0xf]
        %v2165 = vld [vmem:[#allocation9 + $0x10] sm:$0xf]
        %v2166 = vld [vmem:[#allocation9 + $0x14] sm:$0xf]
        %v2167 = vld [vmem:[#allocation9 + $0x18] sm:$0xf]
        %v2168 = vld [vmem:[#allocation9 + $0x1c] sm:$0xf]
        %v2169 = vld [vmem:[#allocation9 + $0x20] sm:$0xf]
        %v2170 = vld [vmem:[#allocation9 + $0x24] sm:$0xf]
        %v2171 = vld [vmem:[#allocation9 + $0x28] sm:$0xf]
        %v2172 = vld [vmem:[#allocation9 + $0x2c] sm:$0xf]
        %v2173 = vld [vmem:[#allocation9 + $0x30] sm:$0xf]
        %v2174 = vld [vmem:[#allocation9 + $0x34] sm:$0xf]
        %v2175 = vld [vmem:[#allocation9 + $0x38] sm:$0xf]
        %v2176 = vld [vmem:[#allocation9 + $0x3c] sm:$0xf]
        %v2193 = vunpack.c.l.b16 %v2161
        %v2194 = vunpack.c.l.b16 %v2162
        %v2195 = vunpack.c.l.b16 %v2163
        %v2196 = vunpack.c.l.b16 %v2164
        %v2197 = vunpack.c.l.b16 %v2165
        %v2198 = vunpack.c.l.b16 %v2166
        %v2199 = vunpack.c.l.b16 %v2167
        %v2200 = vunpack.c.l.b16 %v2168
        %v2201 = vunpack.c.l.b16 %v2169
        %v2202 = vunpack.c.l.b16 %v2170
        %v2203 = vunpack.c.l.b16 %v2171
        %v2204 = vunpack.c.l.b16 %v2172
        %v2205 = vunpack.c.l.b16 %v2173
        %v2206 = vunpack.c.l.b16 %v2174
        %v2207 = vunpack.c.l.b16 %v2175
        %v2208 = vunpack.c.l.b16 %v2176
        %v2209 = vpack.c.b16 %v2194, %v2193
        %v2210 = vpack.c.b16 %v2196, %v2195
        %v2211 = vpack.c.b16 %v2198, %v2197
        %v2212 = vpack.c.b16 %v2200, %v2199
        %v2213 = vpack.c.b16 %v2202, %v2201
        %v2214 = vpack.c.b16 %v2204, %v2203
        %v2215 = vpack.c.b16 %v2206, %v2205
        %v2216 = vpack.c.b16 %v2208, %v2207
        %2225 = vmatpush.bf16.msra.mxu0 %v2216
        %2226 = vmatpush.bf16.msra.mxu0 %v2215
        %2227 = vmatpush.bf16.msra.mxu0 %v2214
        %2228 = vmatpush.bf16.msra.mxu0 %v2213
        %2229 = vmatpush.bf16.msra.mxu0 %v2212
        %2230 = vmatpush.bf16.msra.mxu0 %v2211
        %2231 = vmatpush.bf16.msra.mxu0 %v2210
        %2232 = vmatpush.bf16.msra.mxu0 %v2209
        %2233 = vmatmul.bf16.gmra.mxu0 %v2160
        %v2234 = vpop.f32.mrf.mxu0
        %v2235 = vadd.f32 %v1248, %v2234
        %v2236 = vpop.f32.mrf.mxu0
        %v2237 = vadd.f32 %v1248, %v2236
        %2238 = vdwg.mxu0
        %v2239 = vmul.f32 %v2235, 0.01
        %v2240 = vmul.f32 %v2237, 0.01
        %v2241 = vmax.f32 %v2235, %v2239
        %v2242 = vmax.f32 %v2237, %v2240
        %v2243 = vadd.f32 %v2152, %v2241
        %v2244 = vadd.f32 %v2153, %v2242
        %v2245 = vmul.f32 %v2156, %v2243
        %v2246 = vmul.f32 %v2157, %v2244
        %v2247 = vpack.c.bf16 %v2246, %v2245
        %v2248 = vld [vmem:[#allocation12] sm:$0xf]
        %v2249 = vld [vmem:[#allocation12 + $0x4] sm:$0xf]
        %v2250 = vld [vmem:[#allocation12 + $0x8] sm:$0xf]
        %v2251 = vld [vmem:[#allocation12 + $0xc] sm:$0xf]
        %v2252 = vld [vmem:[#allocation12 + $0x10] sm:$0xf]
        %v2253 = vld [vmem:[#allocation12 + $0x14] sm:$0xf]
        %v2254 = vld [vmem:[#allocation12 + $0x18] sm:$0xf]
        %v2255 = vld [vmem:[#allocation12 + $0x1c] sm:$0xf]
        %v2256 = vld [vmem:[#allocation12 + $0x20] sm:$0xf]
        %v2257 = vld [vmem:[#allocation12 + $0x24] sm:$0xf]
        %v2258 = vld [vmem:[#allocation12 + $0x28] sm:$0xf]
        %v2259 = vld [vmem:[#allocation12 + $0x2c] sm:$0xf]
        %v2260 = vld [vmem:[#allocation12 + $0x30] sm:$0xf]
        %v2261 = vld [vmem:[#allocation12 + $0x34] sm:$0xf]
        %v2262 = vld [vmem:[#allocation12 + $0x38] sm:$0xf]
        %v2263 = vld [vmem:[#allocation12 + $0x3c] sm:$0xf]
        %v2280 = vunpack.c.l.b16 %v2248
        %v2281 = vunpack.c.l.b16 %v2249
        %v2282 = vunpack.c.l.b16 %v2250
        %v2283 = vunpack.c.l.b16 %v2251
        %v2284 = vunpack.c.l.b16 %v2252
        %v2285 = vunpack.c.l.b16 %v2253
        %v2286 = vunpack.c.l.b16 %v2254
        %v2287 = vunpack.c.l.b16 %v2255
        %v2288 = vunpack.c.l.b16 %v2256
        %v2289 = vunpack.c.l.b16 %v2257
        %v2290 = vunpack.c.l.b16 %v2258
        %v2291 = vunpack.c.l.b16 %v2259
        %v2292 = vunpack.c.l.b16 %v2260
        %v2293 = vunpack.c.l.b16 %v2261
        %v2294 = vunpack.c.l.b16 %v2262
        %v2295 = vunpack.c.l.b16 %v2263
        %v2296 = vpack.c.b16 %v2281, %v2280
        %v2297 = vpack.c.b16 %v2283, %v2282
        %v2298 = vpack.c.b16 %v2285, %v2284
        %v2299 = vpack.c.b16 %v2287, %v2286
        %v2300 = vpack.c.b16 %v2289, %v2288
        %v2301 = vpack.c.b16 %v2291, %v2290
        %v2302 = vpack.c.b16 %v2293, %v2292
        %v2303 = vpack.c.b16 %v2295, %v2294
        %2312 = vmatpush.bf16.msra.mxu0 %v2303
        %2313 = vmatpush.bf16.msra.mxu0 %v2302
        %2314 = vmatpush.bf16.msra.mxu0 %v2301
        %2315 = vmatpush.bf16.msra.mxu0 %v2300
        %2316 = vmatpush.bf16.msra.mxu0 %v2299
        %2317 = vmatpush.bf16.msra.mxu0 %v2298
        %2318 = vmatpush.bf16.msra.mxu0 %v2297
        %2319 = vmatpush.bf16.msra.mxu0 %v2296
        %2320 = vmatmul.bf16.gmra.mxu0 %v2247
        %v2321 = vpop.f32.mrf.mxu0
        %v2322 = vadd.f32 %v1519, %v2321
        %v2323 = vpop.f32.mrf.mxu0
        %v2324 = vadd.f32 %v1519, %v2323
        %2325 = vdwg.mxu0
        %v2326 = vmul.f32 %v2322, 0.01
        %v2327 = vmul.f32 %v2324, 0.01
        %v2328 = vmax.f32 %v2322, %v2326
        %v2329 = vmax.f32 %v2324, %v2327
        %v2330 = vpack.c.bf16 %v2329, %v2328
        %v2331 = vld [vmem:[#allocation15] sm:$0xf]
        %v2332 = vld [vmem:[#allocation15 + $0x4] sm:$0xf]
        %v2333 = vld [vmem:[#allocation15 + $0x8] sm:$0xf]
        %v2334 = vld [vmem:[#allocation15 + $0xc] sm:$0xf]
        %v2335 = vld [vmem:[#allocation15 + $0x10] sm:$0xf]
        %v2336 = vld [vmem:[#allocation15 + $0x14] sm:$0xf]
        %v2337 = vld [vmem:[#allocation15 + $0x18] sm:$0xf]
        %v2338 = vld [vmem:[#allocation15 + $0x1c] sm:$0xf]
        %v2339 = vld [vmem:[#allocation15 + $0x20] sm:$0xf]
        %v2340 = vld [vmem:[#allocation15 + $0x24] sm:$0xf]
        %v2341 = vld [vmem:[#allocation15 + $0x28] sm:$0xf]
        %v2342 = vld [vmem:[#allocation15 + $0x2c] sm:$0xf]
        %v2343 = vld [vmem:[#allocation15 + $0x30] sm:$0xf]
        %v2344 = vld [vmem:[#allocation15 + $0x34] sm:$0xf]
        %v2345 = vld [vmem:[#allocation15 + $0x38] sm:$0xf]
        %v2346 = vld [vmem:[#allocation15 + $0x3c] sm:$0xf]
        %v2363 = vunpack.c.l.b16 %v2331
        %v2364 = vunpack.c.l.b16 %v2332
        %v2365 = vunpack.c.l.b16 %v2333
        %v2366 = vunpack.c.l.b16 %v2334
        %v2367 = vunpack.c.l.b16 %v2335
        %v2368 = vunpack.c.l.b16 %v2336
        %v2369 = vunpack.c.l.b16 %v2337
        %v2370 = vunpack.c.l.b16 %v2338
        %v2371 = vunpack.c.l.b16 %v2339
        %v2372 = vunpack.c.l.b16 %v2340
        %v2373 = vunpack.c.l.b16 %v2341
        %v2374 = vunpack.c.l.b16 %v2342
        %v2375 = vunpack.c.l.b16 %v2343
        %v2376 = vunpack.c.l.b16 %v2344
        %v2377 = vunpack.c.l.b16 %v2345
        %v2378 = vunpack.c.l.b16 %v2346
        %v2379 = vpack.c.b16 %v2364, %v2363
        %v2380 = vpack.c.b16 %v2366, %v2365
        %v2381 = vpack.c.b16 %v2368, %v2367
        %v2382 = vpack.c.b16 %v2370, %v2369
        %v2383 = vpack.c.b16 %v2372, %v2371
        %v2384 = vpack.c.b16 %v2374, %v2373
        %v2385 = vpack.c.b16 %v2376, %v2375
        %v2386 = vpack.c.b16 %v2378, %v2377
        %2395 = vmatpush.bf16.msra.mxu0 %v2386
        %2396 = vmatpush.bf16.msra.mxu0 %v2385
        %2397 = vmatpush.bf16.msra.mxu0 %v2384
        %2398 = vmatpush.bf16.msra.mxu0 %v2383
        %2399 = vmatpush.bf16.msra.mxu0 %v2382
        %2400 = vmatpush.bf16.msra.mxu0 %v2381
        %2401 = vmatpush.bf16.msra.mxu0 %v2380
        %2402 = vmatpush.bf16.msra.mxu0 %v2379
        %2403 = vmatmul.bf16.gmra.mxu0 %v2330
        %v2404 = vpop.f32.mrf.mxu0
        %v2405 = vadd.f32 %v1782, %v2404
        %v2406 = vpop.f32.mrf.mxu0
        %v2407 = vadd.f32 %v1782, %v2406
        %2408 = vdwg.mxu0
        %v2409 = vmul.f32 %v2405, 0.01
        %v2410 = vmul.f32 %v2407, 0.01
        %v2411 = vmax.f32 %v2405, %v2409
        %v2412 = vmax.f32 %v2407, %v2410
        %2415 = vrot.lane.b32.xlu0 %v2411, 64
        %v2416 = vpop.permute.xlu0 %2415
        %2417 = vrot.lane.b32.xlu0 %v2412, 64
        %v2418 = vpop.permute.xlu0 %2417
        %v2421 = vmax.f32 %v2411, %v2416
        %v2422 = vmax.f32 %v2412, %v2418
        %v2423 = vmax.f32 %v2030, %v2421
        %v2424 = vmax.f32 %v2031, %v2422
        %v2425 = vadd.f32 %v2423, %v1181
        %v2426 = vadd.f32 %v2424, %v1183
        %v2427 = vpack.c.bf16 %v2426, %v2425
        %v2428 = vld [vmem:[%s15] sm:$0xf]
        %v2429 = vld [vmem:[%s15 + $0x4] sm:$0xf]
        %v2430 = vld [vmem:[%s15 + $0x8] sm:$0xf]
        %v2431 = vld [vmem:[%s15 + $0xc] sm:$0xf]
        %v2432 = vld [vmem:[%s15 + $0x10] sm:$0xf]
        %v2433 = vld [vmem:[%s15 + $0x14] sm:$0xf]
        %v2434 = vld [vmem:[%s15 + $0x18] sm:$0xf]
        %v2435 = vld [vmem:[%s15 + $0x1c] sm:$0xf]
        %v2436 = vld [vmem:[%s16] sm:$0x1]
        %v2438 = vperm.slane %v2436, 0
        %v2448 = vunpack.c.l.b16 %v2428
        %v2449 = vunpack.c.l.b16 %v2429
        %v2450 = vunpack.c.l.b16 %v2430
        %v2451 = vunpack.c.l.b16 %v2431
        %v2452 = vunpack.c.l.b16 %v2432
        %v2453 = vunpack.c.l.b16 %v2433
        %v2454 = vunpack.c.l.b16 %v2434
        %v2455 = vunpack.c.l.b16 %v2435
        %v2456 = vpack.c.b16 %v2449, %v2448
        %v2457 = vpack.c.b16 %v2451, %v2450
        %v2458 = vpack.c.b16 %v2453, %v2452
        %v2459 = vpack.c.b16 %v2455, %v2454
        %v2465 = vsel %vm1206, %v2427, 0
        %2467 = vmatpush.bf16.msra.mxu0 0
        %2468 = vmatpush.bf16.msra.mxu0 0
        %2469 = vmatpush.bf16.msra.mxu0 0
        %2470 = vmatpush.bf16.msra.mxu0 0
        %2471 = vmatpush.bf16.msra.mxu0 %v2459
        %2472 = vmatpush.bf16.msra.mxu0 %v2458
        %2473 = vmatpush.bf16.msra.mxu0 %v2457
        %2474 = vmatpush.bf16.msra.mxu0 %v2456
        %2475 = vmatmul.bf16.gmra.mxu0 %v2465
        %v2476 = vpop.f32.mrf.mxu0
        %v2477 = vadd.f32 %v2438, %v2476
        %v2478 = vpop.f32.mrf.mxu0
        %v2479 = vadd.f32 %v2438, %v2478
        %2480 = vdwg.mxu0
        %v2481 = vmul.f32 %v2477, 0.01
        %v2482 = vmul.f32 %v2479, 0.01
        %v2483 = vmax.f32 %v2477, %v2481
        %v2484 = vmax.f32 %v2479, %v2482
        %v2485 = vpack.c.bf16 %v2484, %v2483
        %v2486 = vld [vmem:[%s17] sm:$0xf]
        %v2487 = vld [vmem:[%s17 + $0x4] sm:$0xf]
        %v2488 = vld [vmem:[%s17 + $0x8] sm:$0xf]
        %v2489 = vld [vmem:[%s17 + $0xc] sm:$0xf]
        %v2490 = vld [vmem:[%s17 + $0x10] sm:$0xf]
        %v2491 = vld [vmem:[%s17 + $0x14] sm:$0xf]
        %v2492 = vld [vmem:[%s17 + $0x18] sm:$0xf]
        %v2493 = vld [vmem:[%s17 + $0x1c] sm:$0xf]
        %v2502 = vunpack.c.l.b16 %v2486
        %v2503 = vunpack.c.l.b16 %v2487
        %v2504 = vunpack.c.l.b16 %v2488
        %v2505 = vunpack.c.l.b16 %v2489
        %v2506 = vunpack.c.l.b16 %v2490
        %v2507 = vunpack.c.l.b16 %v2491
        %v2508 = vunpack.c.l.b16 %v2492
        %v2509 = vunpack.c.l.b16 %v2493
        %v2510 = vpack.c.b16 %v2503, %v2502
        %v2511 = vpack.c.b16 %v2505, %v2504
        %v2512 = vpack.c.b16 %v2507, %v2506
        %v2513 = vpack.c.b16 %v2509, %v2508
        %v2519 = vsel %vm1206, %v2485, 0
        %2521 = vmatpush.bf16.msra.mxu0 0
        %2522 = vmatpush.bf16.msra.mxu0 0
        %2523 = vmatpush.bf16.msra.mxu0 0
        %2524 = vmatpush.bf16.msra.mxu0 0
        %2525 = vmatpush.bf16.msra.mxu0 %v2513
        %2526 = vmatpush.bf16.msra.mxu0 %v2512
        %2527 = vmatpush.bf16.msra.mxu0 %v2511
        %2528 = vmatpush.bf16.msra.mxu0 %v2510
        %2529 = vmatmul.bf16.gmra.mxu0 %v2519
        %v2530 = vpop.f32.mrf.mxu0
        %v2531 = vadd.f32 %v734, %v2530
        %v2532 = vpop.f32.mrf.mxu0
        %v2533 = vadd.f32 %v737, %v2532
        %2534 = vdwg.mxu0
        %vm2535 = vcmask 64512
        %2536 = vst.msk [vmem:[%s731] sm:$0xff] %vm2535, %v2531
        %2537 = vst.msk [vmem:[%s731 + $0x8] sm:$0xff] %vm2535, %v2533
        %s2538 = smul.u32 2, %s36
        %p2539 = scmp.lt.s32.totalorder %s2538, 7
        %s2540 = scalar_select %p2539, %s2538, 7
        %s2541 = smul.addr %s2540, 8
        %s2542 = scalar_lea.vmem %s18, %s2541
        // Predicated region
        $region129: #{tpu_custom_call.1} parent=91 // pred_check
          %p2543 = pneg %p437
        $region130: #{tpu_custom_call.1} parent=91 // pred_check_branch
          %2545 = sbr.rel (%p2543) target = $region132
        $region131: #{tpu_custom_call.1} parent=91 // pred_region
          %s2546 = smul.u32 2, %s36
        $region132: #{tpu_custom_call.1} parent=91 // pred_fallthru
          _
      $region92: #{tpu_custom_call.1} parent=5 // pred_fallthru
        _
      %p2547 = scmp.le.s32.totalorder 2, %s31
      // Predicated region
      $region133: #{tpu_custom_call.1} parent=5 // pred_check
        %p2548 = pneg %p2547
      $region134: #{tpu_custom_call.1} parent=5 // pred_check_branch
        %2550 = sbr.rel (%p2548) target = $region136
      $region135: #{tpu_custom_call.1} parent=5 // pred_region
        %s2551 = ssub.s32 %s31, 2
        // Predicated region
        $region137: #{tpu_custom_call.1} parent=135 // pred_check
          %p2552 = pneg %p443
        $region138: #{tpu_custom_call.1} parent=135 // pred_check_branch
          %2554 = sbr.rel (%p2552) target = $region140
        $region139: #{tpu_custom_call.1} parent=135 // pred_region
          %s2555 = smul.u32 2, %s37
          %p2556 = scmp.lt.s32.totalorder %s2555, 7
          %s2557 = scalar_select %p2556, %s2555, 7
          %s2558 = smul.addr %s2557, 8
          %s2559 = scalar_lea.vmem %s18, %s2558
        $region140: #{tpu_custom_call.1} parent=135 // pred_fallthru
          _
      $region136: #{tpu_custom_call.1} parent=5 // pred_fallthru
        _
    $region6: #{tpu_custom_call.1} parent=1 // loop_footer
      %s35 = sadd.s32 1, %s31
    $region7: #{tpu_custom_call.1} parent=1 // loop_footer_branch
      %30 = sbr.rel target = $region3
    $region8: #{tpu_custom_call.1} parent=1 // loop_exit
      _
    %2560 = vsyncpa [#allocation3], 1
    %s2561 = scalar_lea.sflag [#allocation3], 1
    %2562 = vsyncpa %s2561, 1
    %2563 = vsyncpa [#allocation5], 1
    %2564 = vsyncpa [#allocation8], 1
    %2565 = vsyncpa [#allocation11], 1
    %2566 = vsyncpa [#allocation14], 1

</llo_original>
